<compile_context>
chip_gen: v6e
topology: v6e:2x2x1
jax: 0.10.0
libtpu: 0.0.40
codegen_flags: <defaults>
</compile_context>

<pallas_src>
import jax
import jax.numpy as jnp
import numpy as np
from jax.experimental import pallas as pl
from jax.experimental.pallas import tpu as pltpu


def _make_kernel(N, H, W, Cin, F):
    HW = H * W
    M = N * HW
    eps = 1e-5
    f32 = jnp.float32
    bf16 = jnp.bfloat16

    def conv3x3(src_f32, w_ref, mask_ref):
        """3x3 'same' conv as 9 shift-accumulate MXU matmuls.

        src_f32:  (C, M) f32, spatial flattened on lanes (M = N*H*W).
        w_ref:    (9, F_out, C) bf16, tap t = ky*3 + kx.
        mask_ref: (9, 1, M) f32, 1.0 where the shifted source is in-bounds.
        """
        acc = None
        for ky in range(3):
            for kx in range(3):
                t = ky * 3 + kx
                dy, dx = ky - 1, kx - 1
                offset = dy * W + dx            # source = dst + offset (flat)
                if offset == 0:
                    shifted = src_f32           # center tap: no roll, no mask
                else:
                    shifted = pltpu.roll(src_f32, (-offset) % M, axis=1)
                    shifted = shifted * mask_ref[t]
                contrib = jnp.dot(w_ref[t], shifted.astype(bf16),
                                  preferred_element_type=f32)
                acc = contrib if acc is None else acc + contrib
        return acc                              # (F_out, M) f32

    def batch_norm(a, g_ref, b_ref):
        """Training-mode BN over the M (=N*H*W) lane axis; channels on sublanes."""
        inv_m = 1.0 / M
        mean = jnp.sum(a, axis=1, keepdims=True) * inv_m          # (F, 1)
        cent = a - mean
        var = jnp.sum(cent * cent, axis=1, keepdims=True) * inv_m  # (F, 1)
        return cent * jax.lax.rsqrt(var + eps) * g_ref[...] + b_ref[...]

    def kernel(x_ref, w1_ref, g1_ref, b1_ref, w2_ref, g2_ref, b2_ref,
               mask_ref, out_ref):
        x = x_ref[...]                                            # (Cin, M) f32

        y1 = jnp.maximum(
            batch_norm(conv3x3(x, w1_ref, mask_ref), g1_ref, b1_ref), 0.0)
        y2 = batch_norm(conv3x3(y1, w2_ref, mask_ref), g2_ref, b2_ref)

        # concat(x, y) along channels + ReLU; lane-dense (256-lane) stores.
        for n in range(N):
            lo, hi = n * HW, (n + 1) * HW
            out_ref[n, 0:Cin, :] = jnp.maximum(x[:, lo:hi], 0.0)
            out_ref[n, Cin:Cin + F, :] = jnp.maximum(y2[:, lo:hi], 0.0)

    return kernel


def resnet_forward(x_nchw, params):
    """x_nchw: (N, Cin, H, W) f32; params in PyTorch layouts -> (N, Cin+F, H, W)."""
    w1, g1, b1, w2, g2, b2 = params          # w*: (Cout, Cin, 3, 3) f32 (OIHW)
    N, Cin, H, W = x_nchw.shape
    F = w1.shape[0]
    HW = H * W
    M = N * HW

    # Channel-major, spatial-on-lanes activations: (Cin, N*H*W).
    x_cm = jnp.transpose(x_nchw, (1, 0, 2, 3)).reshape(Cin, M).astype(jnp.float32)

    # Per-tap weight matrices for the bf16 MXU path: (9, F_out, C_in).
    w1_taps = jnp.transpose(w1, (2, 3, 0, 1)).reshape(9, F, Cin).astype(jnp.bfloat16)
    w2_taps = jnp.transpose(w2, (2, 3, 0, 1)).reshape(9, F, F).astype(jnp.bfloat16)

    # Precomputed 0/1 halo masks per tap over the flattened spatial lane axis.
    # (Also kills cross-batch bleed from the flat roll: any wrap lands on an
    # out-of-bounds (h, w) and is zeroed.)
    h_idx = np.arange(H)[:, None]
    w_idx = np.arange(W)[None, :]
    mask_rows = []
    for ky in range(3):
        for kx in range(3):
            dy, dx = ky - 1, kx - 1
            valid = ((h_idx + dy >= 0) & (h_idx + dy < H) &
                     (w_idx + dx >= 0) & (w_idx + dx < W))
            mask_rows.append(np.tile(valid.reshape(HW), N))
    masks = jnp.asarray(np.stack(mask_rows, 0), jnp.float32).reshape(9, 1, M)

    kernel = _make_kernel(N, H, W, Cin, F)

    flops = 2 * M * 9 * Cin * F + 2 * M * 9 * F * F + 16 * M * F
    bytes_accessed = (Cin * M + (Cin + F) * M + 9 * M + 4 * F) * 4 \
        + (w1_taps.size + w2_taps.size) * 2

    out_flat = pl.pallas_call(
        kernel,
        out_shape=jax.ShapeDtypeStruct((N, Cin + F, HW), jnp.float32),
        in_specs=[pl.BlockSpec(memory_space=pltpu.MemorySpace.VMEM)] * 8,
        out_specs=pl.BlockSpec(memory_space=pltpu.MemorySpace.VMEM),
        cost_estimate=pl.CostEstimate(flops=flops, transcendentals=4 * F,
                                      bytes_accessed=bytes_accessed),
    )(x_cm, w1_taps,
      g1.reshape(F, 1).astype(jnp.float32), b1.reshape(F, 1).astype(jnp.float32),
      w2_taps,
      g2.reshape(F, 1).astype(jnp.float32), b2.reshape(F, 1).astype(jnp.float32),
      masks)

    # (N, Cin+F, H*W) -> (N, Cin+F, H, W): pure reshape, no transpose.
    return out_flat.reshape(N, Cin + F, H, W)


def resnet_reference(x_nchw, params):
    """Pure-JAX reference with identical precision choices, for validation."""
    w1, g1, b1, w2, g2, b2 = params
    x = jnp.transpose(x_nchw, (0, 2, 3, 1)).astype(jnp.float32)   # NHWC
    w1_hwio = jnp.transpose(w1, (2, 3, 1, 0))
    w2_hwio = jnp.transpose(w2, (2, 3, 1, 0))

    def conv(a, w):
        return jax.lax.conv_general_dilated(
            a.astype(jnp.bfloat16), w.astype(jnp.bfloat16),
            window_strides=(1, 1), padding=((1, 1), (1, 1)),
            dimension_numbers=("NHWC", "HWIO", "NHWC"),
            preferred_element_type=jnp.float32)

    def bn(a, g, b, eps=1e-5):
        mean = jnp.mean(a, axis=(0, 1, 2), keepdims=True)
        var = jnp.mean((a - mean) ** 2, axis=(0, 1, 2), keepdims=True)
        return (a - mean) * jax.lax.rsqrt(var + eps) * g + b

    y = jax.nn.relu(bn(conv(x, w1_hwio), g1, b1))
    y = bn(conv(y, w2_hwio), g2, b2)
    out = jax.nn.relu(jnp.concatenate([x, y], axis=-1))
    return jnp.transpose(out, (0, 3, 1, 2))


def init_params(key, n_channels_in, n_features):
    """Weights in PyTorch OIHW layout (Cout, Cin, kh, kw)."""
    k1, k2, k3, k4, k5, k6 = jax.random.split(key, 6)
    fan1 = n_channels_in * 9
    w1 = jax.random.normal(k1, (n_features, n_channels_in, 3, 3),
                           jnp.float32) * (1.0 / np.sqrt(fan1))
    fan2 = n_features * 9
    w2 = jax.random.normal(k2, (n_features, n_features, 3, 3),
                           jnp.float32) * (1.0 / np.sqrt(fan2))
    g1 = 1.0 + 0.1 * jax.random.normal(k3, (n_features,), jnp.float32)
    b1 = 0.1 * jax.random.normal(k4, (n_features,), jnp.float32)
    g2 = 1.0 + 0.1 * jax.random.normal(k5, (n_features,), jnp.float32)
    b2 = 0.1 * jax.random.normal(k6, (n_features,), jnp.float32)
    return (w1, g1, b1, w2, g2, b2)


if __name__ == "__main__":
    key = jax.random.PRNGKey(0)
    kx, kp = jax.random.split(key)

    N, Cin, H, W = 2, 4, 16, 16
    F = 8

    x = jax.random.normal(kx, (N, Cin, H, W), jnp.float32)
    params = init_params(kp, Cin, F)

    out = jax.block_until_ready(resnet_forward(x, params))
    ref = jax.block_until_ready(resnet_reference(x, params))

    assert out.shape == (N, Cin + F, H, W), out.shape
    np.testing.assert_allclose(np.asarray(out), np.asarray(ref),
                               rtol=5e-4, atol=5e-4)
    print("KERNEL_OK")
</pallas_src>

<mosaic_0001>
module attributes {stable_mosaic.version = 11 : i64} {
  func.func @kernel(%arg0: memref<4x512xf32, #tpu.memory_space<vmem>>, %arg1: memref<9x8x4xbf16, #tpu.memory_space<vmem>>, %arg2: memref<8x1xf32, #tpu.memory_space<vmem>>, %arg3: memref<8x1xf32, #tpu.memory_space<vmem>>, %arg4: memref<9x8x8xbf16, #tpu.memory_space<vmem>>, %arg5: memref<8x1xf32, #tpu.memory_space<vmem>>, %arg6: memref<8x1xf32, #tpu.memory_space<vmem>>, %arg7: memref<9x1x512xf32, #tpu.memory_space<vmem>>, %arg8: memref<2x12x256xf32, #tpu.memory_space<vmem>>) attributes {dimension_semantics = [], scalar_prefetch = 0 : i64, scratch_operands = 0 : i64, tpu.core_type = #tpu.core_type<tc>} {
    %c0 = arith.constant 0 : index
    %c0_0 = arith.constant 0 : index
    %0 = vector.load %arg0[%c0, %c0_0] : memref<4x512xf32, #tpu.memory_space<vmem>>, vector<4x512xf32>
    %c17_i32 = arith.constant 17 : i32
    %1 = tpu.dynamic_rotate %0 by %c17_i32 dim 1 : vector<4x512xf32>, i32 -> vector<4x512xf32>
    %c0_1 = arith.constant 0 : index
    %c0_2 = arith.constant 0 : index
    %c0_3 = arith.constant 0 : index
    %2 = vector.load %arg7[%c0_1, %c0_2, %c0_3] : memref<9x1x512xf32, #tpu.memory_space<vmem>>, vector<1x1x512xf32>
    %3 = vector.shape_cast %2 : vector<1x1x512xf32> to vector<1x512xf32>
    %4 = vector.broadcast %3 : vector<1x512xf32> to vector<4x512xf32>
    %5 = arith.mulf %1, %4 : vector<4x512xf32>
    %c0_4 = arith.constant 0 : index
    %c0_5 = arith.constant 0 : index
    %c0_6 = arith.constant 0 : index
    %6 = vector.load %arg1[%c0_4, %c0_5, %c0_6] : memref<9x8x4xbf16, #tpu.memory_space<vmem>>, vector<1x8x4xbf16>
    %7 = vector.shape_cast %6 : vector<1x8x4xbf16> to vector<8x4xbf16>
    %8 = arith.truncf %5 : vector<4x512xf32> to vector<4x512xbf16>
    %cst = arith.constant dense<0.000000e+00> : vector<8x512xf32>
    %9 = tpu.matmul %7, %8, %cst {dimension_numbers = #tpu.dot_dimension_numbers<[1], [0], [0], [1], [0, 0, 1, 1], [], []>} : vector<8x4xbf16>, vector<4x512xbf16>, vector<8x512xf32> -> vector<8x512xf32>
    %c16_i32 = arith.constant 16 : i32
    %10 = tpu.dynamic_rotate %0 by %c16_i32 dim 1 : vector<4x512xf32>, i32 -> vector<4x512xf32>
    %c1 = arith.constant 1 : index
    %c0_7 = arith.constant 0 : index
    %c0_8 = arith.constant 0 : index
    %11 = vector.load %arg7[%c1, %c0_7, %c0_8] : memref<9x1x512xf32, #tpu.memory_space<vmem>>, vector<1x1x512xf32>
    %12 = vector.shape_cast %11 : vector<1x1x512xf32> to vector<1x512xf32>
    %13 = vector.broadcast %12 : vector<1x512xf32> to vector<4x512xf32>
    %14 = arith.mulf %10, %13 : vector<4x512xf32>
    %c1_9 = arith.constant 1 : index
    %c0_10 = arith.constant 0 : index
    %c0_11 = arith.constant 0 : index
    %15 = vector.load %arg1[%c1_9, %c0_10, %c0_11] : memref<9x8x4xbf16, #tpu.memory_space<vmem>>, vector<1x8x4xbf16>
    %16 = vector.shape_cast %15 : vector<1x8x4xbf16> to vector<8x4xbf16>
    %17 = arith.truncf %14 : vector<4x512xf32> to vector<4x512xbf16>
    %cst_12 = arith.constant dense<0.000000e+00> : vector<8x512xf32>
    %18 = tpu.matmul %16, %17, %cst_12 {dimension_numbers = #tpu.dot_dimension_numbers<[1], [0], [0], [1], [0, 0, 1, 1], [], []>} : vector<8x4xbf16>, vector<4x512xbf16>, vector<8x512xf32> -> vector<8x512xf32>
    %19 = arith.addf %9, %18 : vector<8x512xf32>
    %c15_i32 = arith.constant 15 : i32
    %20 = tpu.dynamic_rotate %0 by %c15_i32 dim 1 : vector<4x512xf32>, i32 -> vector<4x512xf32>
    %c2 = arith.constant 2 : index
    %c0_13 = arith.constant 0 : index
    %c0_14 = arith.constant 0 : index
    %21 = vector.load %arg7[%c2, %c0_13, %c0_14] : memref<9x1x512xf32, #tpu.memory_space<vmem>>, vector<1x1x512xf32>
    %22 = vector.shape_cast %21 : vector<1x1x512xf32> to vector<1x512xf32>
    %23 = vector.broadcast %22 : vector<1x512xf32> to vector<4x512xf32>
    %24 = arith.mulf %20, %23 : vector<4x512xf32>
    %c2_15 = arith.constant 2 : index
    %c0_16 = arith.constant 0 : index
    %c0_17 = arith.constant 0 : index
    %25 = vector.load %arg1[%c2_15, %c0_16, %c0_17] : memref<9x8x4xbf16, #tpu.memory_space<vmem>>, vector<1x8x4xbf16>
    %26 = vector.shape_cast %25 : vector<1x8x4xbf16> to vector<8x4xbf16>
    %27 = arith.truncf %24 : vector<4x512xf32> to vector<4x512xbf16>
    %cst_18 = arith.constant dense<0.000000e+00> : vector<8x512xf32>
    %28 = tpu.matmul %26, %27, %cst_18 {dimension_numbers = #tpu.dot_dimension_numbers<[1], [0], [0], [1], [0, 0, 1, 1], [], []>} : vector<8x4xbf16>, vector<4x512xbf16>, vector<8x512xf32> -> vector<8x512xf32>
    %29 = arith.addf %19, %28 : vector<8x512xf32>
    %c1_i32 = arith.constant 1 : i32
    %30 = tpu.dynamic_rotate %0 by %c1_i32 dim 1 : vector<4x512xf32>, i32 -> vector<4x512xf32>
    %c3 = arith.constant 3 : index
    %c0_19 = arith.constant 0 : index
    %c0_20 = arith.constant 0 : index
    %31 = vector.load %arg7[%c3, %c0_19, %c0_20] : memref<9x1x512xf32, #tpu.memory_space<vmem>>, vector<1x1x512xf32>
    %32 = vector.shape_cast %31 : vector<1x1x512xf32> to vector<1x512xf32>
    %33 = vector.broadcast %32 : vector<1x512xf32> to vector<4x512xf32>
    %34 = arith.mulf %30, %33 : vector<4x512xf32>
    %c3_21 = arith.constant 3 : index
    %c0_22 = arith.constant 0 : index
    %c0_23 = arith.constant 0 : index
    %35 = vector.load %arg1[%c3_21, %c0_22, %c0_23] : memref<9x8x4xbf16, #tpu.memory_space<vmem>>, vector<1x8x4xbf16>
    %36 = vector.shape_cast %35 : vector<1x8x4xbf16> to vector<8x4xbf16>
    %37 = arith.truncf %34 : vector<4x512xf32> to vector<4x512xbf16>
    %cst_24 = arith.constant dense<0.000000e+00> : vector<8x512xf32>
    %38 = tpu.matmul %36, %37, %cst_24 {dimension_numbers = #tpu.dot_dimension_numbers<[1], [0], [0], [1], [0, 0, 1, 1], [], []>} : vector<8x4xbf16>, vector<4x512xbf16>, vector<8x512xf32> -> vector<8x512xf32>
    %39 = arith.addf %29, %38 : vector<8x512xf32>
    %c4 = arith.constant 4 : index
    %c0_25 = arith.constant 0 : index
    %c0_26 = arith.constant 0 : index
    %40 = vector.load %arg1[%c4, %c0_25, %c0_26] : memref<9x8x4xbf16, #tpu.memory_space<vmem>>, vector<1x8x4xbf16>
    %41 = vector.shape_cast %40 : vector<1x8x4xbf16> to vector<8x4xbf16>
    %42 = arith.truncf %0 : vector<4x512xf32> to vector<4x512xbf16>
    %cst_27 = arith.constant dense<0.000000e+00> : vector<8x512xf32>
    %43 = tpu.matmul %41, %42, %cst_27 {dimension_numbers = #tpu.dot_dimension_numbers<[1], [0], [0], [1], [0, 0, 1, 1], [], []>} : vector<8x4xbf16>, vector<4x512xbf16>, vector<8x512xf32> -> vector<8x512xf32>
    %44 = arith.addf %39, %43 : vector<8x512xf32>
    %c511_i32 = arith.constant 511 : i32
    %45 = tpu.dynamic_rotate %0 by %c511_i32 dim 1 : vector<4x512xf32>, i32 -> vector<4x512xf32>
    %c5 = arith.constant 5 : index
    %c0_28 = arith.constant 0 : index
    %c0_29 = arith.constant 0 : index
    %46 = vector.load %arg7[%c5, %c0_28, %c0_29] : memref<9x1x512xf32, #tpu.memory_space<vmem>>, vector<1x1x512xf32>
    %47 = vector.shape_cast %46 : vector<1x1x512xf32> to vector<1x512xf32>
    %48 = vector.broadcast %47 : vector<1x512xf32> to vector<4x512xf32>
    %49 = arith.mulf %45, %48 : vector<4x512xf32>
    %c5_30 = arith.constant 5 : index
    %c0_31 = arith.constant 0 : index
    %c0_32 = arith.constant 0 : index
    %50 = vector.load %arg1[%c5_30, %c0_31, %c0_32] : memref<9x8x4xbf16, #tpu.memory_space<vmem>>, vector<1x8x4xbf16>
    %51 = vector.shape_cast %50 : vector<1x8x4xbf16> to vector<8x4xbf16>
    %52 = arith.truncf %49 : vector<4x512xf32> to vector<4x512xbf16>
    %cst_33 = arith.constant dense<0.000000e+00> : vector<8x512xf32>
    %53 = tpu.matmul %51, %52, %cst_33 {dimension_numbers = #tpu.dot_dimension_numbers<[1], [0], [0], [1], [0, 0, 1, 1], [], []>} : vector<8x4xbf16>, vector<4x512xbf16>, vector<8x512xf32> -> vector<8x512xf32>
    %54 = arith.addf %44, %53 : vector<8x512xf32>
    %c497_i32 = arith.constant 497 : i32
    %55 = tpu.dynamic_rotate %0 by %c497_i32 dim 1 : vector<4x512xf32>, i32 -> vector<4x512xf32>
    %c6 = arith.constant 6 : index
    %c0_34 = arith.constant 0 : index
    %c0_35 = arith.constant 0 : index
    %56 = vector.load %arg7[%c6, %c0_34, %c0_35] : memref<9x1x512xf32, #tpu.memory_space<vmem>>, vector<1x1x512xf32>
    %57 = vector.shape_cast %56 : vector<1x1x512xf32> to vector<1x512xf32>
    %58 = vector.broadcast %57 : vector<1x512xf32> to vector<4x512xf32>
    %59 = arith.mulf %55, %58 : vector<4x512xf32>
    %c6_36 = arith.constant 6 : index
    %c0_37 = arith.constant 0 : index
    %c0_38 = arith.constant 0 : index
    %60 = vector.load %arg1[%c6_36, %c0_37, %c0_38] : memref<9x8x4xbf16, #tpu.memory_space<vmem>>, vector<1x8x4xbf16>
    %61 = vector.shape_cast %60 : vector<1x8x4xbf16> to vector<8x4xbf16>
    %62 = arith.truncf %59 : vector<4x512xf32> to vector<4x512xbf16>
    %cst_39 = arith.constant dense<0.000000e+00> : vector<8x512xf32>
    %63 = tpu.matmul %61, %62, %cst_39 {dimension_numbers = #tpu.dot_dimension_numbers<[1], [0], [0], [1], [0, 0, 1, 1], [], []>} : vector<8x4xbf16>, vector<4x512xbf16>, vector<8x512xf32> -> vector<8x512xf32>
    %64 = arith.addf %54, %63 : vector<8x512xf32>
    %c496_i32 = arith.constant 496 : i32
    %65 = tpu.dynamic_rotate %0 by %c496_i32 dim 1 : vector<4x512xf32>, i32 -> vector<4x512xf32>
    %c7 = arith.constant 7 : index
    %c0_40 = arith.constant 0 : index
    %c0_41 = arith.constant 0 : index
    %66 = vector.load %arg7[%c7, %c0_40, %c0_41] : memref<9x1x512xf32, #tpu.memory_space<vmem>>, vector<1x1x512xf32>
    %67 = vector.shape_cast %66 : vector<1x1x512xf32> to vector<1x512xf32>
    %68 = vector.broadcast %67 : vector<1x512xf32> to vector<4x512xf32>
    %69 = arith.mulf %65, %68 : vector<4x512xf32>
    %c7_42 = arith.constant 7 : index
    %c0_43 = arith.constant 0 : index
    %c0_44 = arith.constant 0 : index
    %70 = vector.load %arg1[%c7_42, %c0_43, %c0_44] : memref<9x8x4xbf16, #tpu.memory_space<vmem>>, vector<1x8x4xbf16>
    %71 = vector.shape_cast %70 : vector<1x8x4xbf16> to vector<8x4xbf16>
    %72 = arith.truncf %69 : vector<4x512xf32> to vector<4x512xbf16>
    %cst_45 = arith.constant dense<0.000000e+00> : vector<8x512xf32>
    %73 = tpu.matmul %71, %72, %cst_45 {dimension_numbers = #tpu.dot_dimension_numbers<[1], [0], [0], [1], [0, 0, 1, 1], [], []>} : vector<8x4xbf16>, vector<4x512xbf16>, vector<8x512xf32> -> vector<8x512xf32>
    %74 = arith.addf %64, %73 : vector<8x512xf32>
    %c495_i32 = arith.constant 495 : i32
    %75 = tpu.dynamic_rotate %0 by %c495_i32 dim 1 : vector<4x512xf32>, i32 -> vector<4x512xf32>
    %c8 = arith.constant 8 : index
    %c0_46 = arith.constant 0 : index
    %c0_47 = arith.constant 0 : index
    %76 = vector.load %arg7[%c8, %c0_46, %c0_47] : memref<9x1x512xf32, #tpu.memory_space<vmem>>, vector<1x1x512xf32>
    %77 = vector.shape_cast %76 : vector<1x1x512xf32> to vector<1x512xf32>
    %78 = vector.broadcast %77 : vector<1x512xf32> to vector<4x512xf32>
    %79 = arith.mulf %75, %78 : vector<4x512xf32>
    %c8_48 = arith.constant 8 : index
    %c0_49 = arith.constant 0 : index
    %c0_50 = arith.constant 0 : index
    %80 = vector.load %arg1[%c8_48, %c0_49, %c0_50] : memref<9x8x4xbf16, #tpu.memory_space<vmem>>, vector<1x8x4xbf16>
    %81 = vector.shape_cast %80 : vector<1x8x4xbf16> to vector<8x4xbf16>
    %82 = arith.truncf %79 : vector<4x512xf32> to vector<4x512xbf16>
    %cst_51 = arith.constant dense<0.000000e+00> : vector<8x512xf32>
    %83 = tpu.matmul %81, %82, %cst_51 {dimension_numbers = #tpu.dot_dimension_numbers<[1], [0], [0], [1], [0, 0, 1, 1], [], []>} : vector<8x4xbf16>, vector<4x512xbf16>, vector<8x512xf32> -> vector<8x512xf32>
    %84 = arith.addf %74, %83 : vector<8x512xf32>
    %cst_52 = arith.constant dense<0.000000e+00> : vector<8xf32>
    %85 = vector.multi_reduction <add>, %84, %cst_52 [1] : vector<8x512xf32> to vector<8xf32>
    %86 = vector.shape_cast %85 : vector<8xf32> to vector<8x1xf32>
    %cst_53 = arith.constant 0.001953125 : f32
    %87 = vector.broadcast %cst_53 : f32 to vector<8x1xf32>
    %88 = arith.mulf %86, %87 : vector<8x1xf32>
    %89 = vector.broadcast %88 : vector<8x1xf32> to vector<8x512xf32>
    %90 = arith.subf %84, %89 : vector<8x512xf32>
    %91 = arith.mulf %90, %90 : vector<8x512xf32>
    %cst_54 = arith.constant dense<0.000000e+00> : vector<8xf32>
    %92 = vector.multi_reduction <add>, %91, %cst_54 [1] : vector<8x512xf32> to vector<8xf32>
    %93 = vector.shape_cast %92 : vector<8xf32> to vector<8x1xf32>
    %cst_55 = arith.constant 0.001953125 : f32
    %94 = vector.broadcast %cst_55 : f32 to vector<8x1xf32>
    %95 = arith.mulf %93, %94 : vector<8x1xf32>
    %cst_56 = arith.constant 9.99999974E-6 : f32
    %96 = vector.broadcast %cst_56 : f32 to vector<8x1xf32>
    %97 = arith.addf %95, %96 : vector<8x1xf32>
    %98 = math.rsqrt %97 : vector<8x1xf32>
    %99 = vector.broadcast %98 : vector<8x1xf32> to vector<8x512xf32>
    %100 = arith.mulf %90, %99 : vector<8x512xf32>
    %c0_57 = arith.constant 0 : index
    %c0_58 = arith.constant 0 : index
    %101 = vector.load %arg2[%c0_57, %c0_58] : memref<8x1xf32, #tpu.memory_space<vmem>>, vector<8x1xf32>
    %102 = vector.broadcast %101 : vector<8x1xf32> to vector<8x512xf32>
    %103 = arith.mulf %100, %102 : vector<8x512xf32>
    %c0_59 = arith.constant 0 : index
    %c0_60 = arith.constant 0 : index
    %104 = vector.load %arg3[%c0_59, %c0_60] : memref<8x1xf32, #tpu.memory_space<vmem>>, vector<8x1xf32>
    %105 = vector.broadcast %104 : vector<8x1xf32> to vector<8x512xf32>
    %106 = arith.addf %103, %105 : vector<8x512xf32>
    %cst_61 = arith.constant 0.000000e+00 : f32
    %107 = vector.broadcast %cst_61 : f32 to vector<8x512xf32>
    %108 = arith.maximumf %106, %107 : vector<8x512xf32>
    %c17_i32_62 = arith.constant 17 : i32
    %109 = tpu.dynamic_rotate %108 by %c17_i32_62 dim 1 : vector<8x512xf32>, i32 -> vector<8x512xf32>
    %c0_63 = arith.constant 0 : index
    %c0_64 = arith.constant 0 : index
    %c0_65 = arith.constant 0 : index
    %110 = vector.load %arg7[%c0_63, %c0_64, %c0_65] : memref<9x1x512xf32, #tpu.memory_space<vmem>>, vector<1x1x512xf32>
    %111 = vector.shape_cast %110 : vector<1x1x512xf32> to vector<1x512xf32>
    %112 = vector.broadcast %111 : vector<1x512xf32> to vector<8x512xf32>
    %113 = arith.mulf %109, %112 : vector<8x512xf32>
    %c0_66 = arith.constant 0 : index
    %c0_67 = arith.constant 0 : index
    %c0_68 = arith.constant 0 : index
    %114 = vector.load %arg4[%c0_66, %c0_67, %c0_68] : memref<9x8x8xbf16, #tpu.memory_space<vmem>>, vector<1x8x8xbf16>
    %115 = vector.shape_cast %114 : vector<1x8x8xbf16> to vector<8x8xbf16>
    %116 = arith.truncf %113 : vector<8x512xf32> to vector<8x512xbf16>
    %cst_69 = arith.constant dense<0.000000e+00> : vector<8x512xf32>
    %117 = tpu.matmul %115, %116, %cst_69 {dimension_numbers = #tpu.dot_dimension_numbers<[1], [0], [0], [1], [0, 0, 1, 1], [], []>} : vector<8x8xbf16>, vector<8x512xbf16>, vector<8x512xf32> -> vector<8x512xf32>
    %c16_i32_70 = arith.constant 16 : i32
    %118 = tpu.dynamic_rotate %108 by %c16_i32_70 dim 1 : vector<8x512xf32>, i32 -> vector<8x512xf32>
    %c1_71 = arith.constant 1 : index
    %c0_72 = arith.constant 0 : index
    %c0_73 = arith.constant 0 : index
    %119 = vector.load %arg7[%c1_71, %c0_72, %c0_73] : memref<9x1x512xf32, #tpu.memory_space<vmem>>, vector<1x1x512xf32>
    %120 = vector.shape_cast %119 : vector<1x1x512xf32> to vector<1x512xf32>
    %121 = vector.broadcast %120 : vector<1x512xf32> to vector<8x512xf32>
    %122 = arith.mulf %118, %121 : vector<8x512xf32>
    %c1_74 = arith.constant 1 : index
    %c0_75 = arith.constant 0 : index
    %c0_76 = arith.constant 0 : index
    %123 = vector.load %arg4[%c1_74, %c0_75, %c0_76] : memref<9x8x8xbf16, #tpu.memory_space<vmem>>, vector<1x8x8xbf16>
    %124 = vector.shape_cast %123 : vector<1x8x8xbf16> to vector<8x8xbf16>
    %125 = arith.truncf %122 : vector<8x512xf32> to vector<8x512xbf16>
    %cst_77 = arith.constant dense<0.000000e+00> : vector<8x512xf32>
    %126 = tpu.matmul %124, %125, %cst_77 {dimension_numbers = #tpu.dot_dimension_numbers<[1], [0], [0], [1], [0, 0, 1, 1], [], []>} : vector<8x8xbf16>, vector<8x512xbf16>, vector<8x512xf32> -> vector<8x512xf32>
    %127 = arith.addf %117, %126 : vector<8x512xf32>
    %c15_i32_78 = arith.constant 15 : i32
    %128 = tpu.dynamic_rotate %108 by %c15_i32_78 dim 1 : vector<8x512xf32>, i32 -> vector<8x512xf32>
    %c2_79 = arith.constant 2 : index
    %c0_80 = arith.constant 0 : index
    %c0_81 = arith.constant 0 : index
    %129 = vector.load %arg7[%c2_79, %c0_80, %c0_81] : memref<9x1x512xf32, #tpu.memory_space<vmem>>, vector<1x1x512xf32>
    %130 = vector.shape_cast %129 : vector<1x1x512xf32> to vector<1x512xf32>
    %131 = vector.broadcast %130 : vector<1x512xf32> to vector<8x512xf32>
    %132 = arith.mulf %128, %131 : vector<8x512xf32>
    %c2_82 = arith.constant 2 : index
    %c0_83 = arith.constant 0 : index
    %c0_84 = arith.constant 0 : index
    %133 = vector.load %arg4[%c2_82, %c0_83, %c0_84] : memref<9x8x8xbf16, #tpu.memory_space<vmem>>, vector<1x8x8xbf16>
    %134 = vector.shape_cast %133 : vector<1x8x8xbf16> to vector<8x8xbf16>
    %135 = arith.truncf %132 : vector<8x512xf32> to vector<8x512xbf16>
    %cst_85 = arith.constant dense<0.000000e+00> : vector<8x512xf32>
    %136 = tpu.matmul %134, %135, %cst_85 {dimension_numbers = #tpu.dot_dimension_numbers<[1], [0], [0], [1], [0, 0, 1, 1], [], []>} : vector<8x8xbf16>, vector<8x512xbf16>, vector<8x512xf32> -> vector<8x512xf32>
    %137 = arith.addf %127, %136 : vector<8x512xf32>
    %c1_i32_86 = arith.constant 1 : i32
    %138 = tpu.dynamic_rotate %108 by %c1_i32_86 dim 1 : vector<8x512xf32>, i32 -> vector<8x512xf32>
    %c3_87 = arith.constant 3 : index
    %c0_88 = arith.constant 0 : index
    %c0_89 = arith.constant 0 : index
    %139 = vector.load %arg7[%c3_87, %c0_88, %c0_89] : memref<9x1x512xf32, #tpu.memory_space<vmem>>, vector<1x1x512xf32>
    %140 = vector.shape_cast %139 : vector<1x1x512xf32> to vector<1x512xf32>
    %141 = vector.broadcast %140 : vector<1x512xf32> to vector<8x512xf32>
    %142 = arith.mulf %138, %141 : vector<8x512xf32>
    %c3_90 = arith.constant 3 : index
    %c0_91 = arith.constant 0 : index
    %c0_92 = arith.constant 0 : index
    %143 = vector.load %arg4[%c3_90, %c0_91, %c0_92] : memref<9x8x8xbf16, #tpu.memory_space<vmem>>, vector<1x8x8xbf16>
    %144 = vector.shape_cast %143 : vector<1x8x8xbf16> to vector<8x8xbf16>
    %145 = arith.truncf %142 : vector<8x512xf32> to vector<8x512xbf16>
    %cst_93 = arith.constant dense<0.000000e+00> : vector<8x512xf32>
    %146 = tpu.matmul %144, %145, %cst_93 {dimension_numbers = #tpu.dot_dimension_numbers<[1], [0], [0], [1], [0, 0, 1, 1], [], []>} : vector<8x8xbf16>, vector<8x512xbf16>, vector<8x512xf32> -> vector<8x512xf32>
    %147 = arith.addf %137, %146 : vector<8x512xf32>
    %c4_94 = arith.constant 4 : index
    %c0_95 = arith.constant 0 : index
    %c0_96 = arith.constant 0 : index
    %148 = vector.load %arg4[%c4_94, %c0_95, %c0_96] : memref<9x8x8xbf16, #tpu.memory_space<vmem>>, vector<1x8x8xbf16>
    %149 = vector.shape_cast %148 : vector<1x8x8xbf16> to vector<8x8xbf16>
    %150 = arith.truncf %108 : vector<8x512xf32> to vector<8x512xbf16>
    %cst_97 = arith.constant dense<0.000000e+00> : vector<8x512xf32>
    %151 = tpu.matmul %149, %150, %cst_97 {dimension_numbers = #tpu.dot_dimension_numbers<[1], [0], [0], [1], [0, 0, 1, 1], [], []>} : vector<8x8xbf16>, vector<8x512xbf16>, vector<8x512xf32> -> vector<8x512xf32>
    %152 = arith.addf %147, %151 : vector<8x512xf32>
    %c511_i32_98 = arith.constant 511 : i32
    %153 = tpu.dynamic_rotate %108 by %c511_i32_98 dim 1 : vector<8x512xf32>, i32 -> vector<8x512xf32>
    %c5_99 = arith.constant 5 : index
    %c0_100 = arith.constant 0 : index
    %c0_101 = arith.constant 0 : index
    %154 = vector.load %arg7[%c5_99, %c0_100, %c0_101] : memref<9x1x512xf32, #tpu.memory_space<vmem>>, vector<1x1x512xf32>
    %155 = vector.shape_cast %154 : vector<1x1x512xf32> to vector<1x512xf32>
    %156 = vector.broadcast %155 : vector<1x512xf32> to vector<8x512xf32>
    %157 = arith.mulf %153, %156 : vector<8x512xf32>
    %c5_102 = arith.constant 5 : index
    %c0_103 = arith.constant 0 : index
    %c0_104 = arith.constant 0 : index
    %158 = vector.load %arg4[%c5_102, %c0_103, %c0_104] : memref<9x8x8xbf16, #tpu.memory_space<vmem>>, vector<1x8x8xbf16>
    %159 = vector.shape_cast %158 : vector<1x8x8xbf16> to vector<8x8xbf16>
    %160 = arith.truncf %157 : vector<8x512xf32> to vector<8x512xbf16>
    %cst_105 = arith.constant dense<0.000000e+00> : vector<8x512xf32>
    %161 = tpu.matmul %159, %160, %cst_105 {dimension_numbers = #tpu.dot_dimension_numbers<[1], [0], [0], [1], [0, 0, 1, 1], [], []>} : vector<8x8xbf16>, vector<8x512xbf16>, vector<8x512xf32> -> vector<8x512xf32>
    %162 = arith.addf %152, %161 : vector<8x512xf32>
    %c497_i32_106 = arith.constant 497 : i32
    %163 = tpu.dynamic_rotate %108 by %c497_i32_106 dim 1 : vector<8x512xf32>, i32 -> vector<8x512xf32>
    %c6_107 = arith.constant 6 : index
    %c0_108 = arith.constant 0 : index
    %c0_109 = arith.constant 0 : index
    %164 = vector.load %arg7[%c6_107, %c0_108, %c0_109] : memref<9x1x512xf32, #tpu.memory_space<vmem>>, vector<1x1x512xf32>
    %165 = vector.shape_cast %164 : vector<1x1x512xf32> to vector<1x512xf32>
    %166 = vector.broadcast %165 : vector<1x512xf32> to vector<8x512xf32>
    %167 = arith.mulf %163, %166 : vector<8x512xf32>
    %c6_110 = arith.constant 6 : index
    %c0_111 = arith.constant 0 : index
    %c0_112 = arith.constant 0 : index
    %168 = vector.load %arg4[%c6_110, %c0_111, %c0_112] : memref<9x8x8xbf16, #tpu.memory_space<vmem>>, vector<1x8x8xbf16>
    %169 = vector.shape_cast %168 : vector<1x8x8xbf16> to vector<8x8xbf16>
    %170 = arith.truncf %167 : vector<8x512xf32> to vector<8x512xbf16>
    %cst_113 = arith.constant dense<0.000000e+00> : vector<8x512xf32>
    %171 = tpu.matmul %169, %170, %cst_113 {dimension_numbers = #tpu.dot_dimension_numbers<[1], [0], [0], [1], [0, 0, 1, 1], [], []>} : vector<8x8xbf16>, vector<8x512xbf16>, vector<8x512xf32> -> vector<8x512xf32>
    %172 = arith.addf %162, %171 : vector<8x512xf32>
    %c496_i32_114 = arith.constant 496 : i32
    %173 = tpu.dynamic_rotate %108 by %c496_i32_114 dim 1 : vector<8x512xf32>, i32 -> vector<8x512xf32>
    %c7_115 = arith.constant 7 : index
    %c0_116 = arith.constant 0 : index
    %c0_117 = arith.constant 0 : index
    %174 = vector.load %arg7[%c7_115, %c0_116, %c0_117] : memref<9x1x512xf32, #tpu.memory_space<vmem>>, vector<1x1x512xf32>
    %175 = vector.shape_cast %174 : vector<1x1x512xf32> to vector<1x512xf32>
    %176 = vector.broadcast %175 : vector<1x512xf32> to vector<8x512xf32>
    %177 = arith.mulf %173, %176 : vector<8x512xf32>
    %c7_118 = arith.constant 7 : index
    %c0_119 = arith.constant 0 : index
    %c0_120 = arith.constant 0 : index
    %178 = vector.load %arg4[%c7_118, %c0_119, %c0_120] : memref<9x8x8xbf16, #tpu.memory_space<vmem>>, vector<1x8x8xbf16>
    %179 = vector.shape_cast %178 : vector<1x8x8xbf16> to vector<8x8xbf16>
    %180 = arith.truncf %177 : vector<8x512xf32> to vector<8x512xbf16>
    %cst_121 = arith.constant dense<0.000000e+00> : vector<8x512xf32>
    %181 = tpu.matmul %179, %180, %cst_121 {dimension_numbers = #tpu.dot_dimension_numbers<[1], [0], [0], [1], [0, 0, 1, 1], [], []>} : vector<8x8xbf16>, vector<8x512xbf16>, vector<8x512xf32> -> vector<8x512xf32>
    %182 = arith.addf %172, %181 : vector<8x512xf32>
    %c495_i32_122 = arith.constant 495 : i32
    %183 = tpu.dynamic_rotate %108 by %c495_i32_122 dim 1 : vector<8x512xf32>, i32 -> vector<8x512xf32>
    %c8_123 = arith.constant 8 : index
    %c0_124 = arith.constant 0 : index
    %c0_125 = arith.constant 0 : index
    %184 = vector.load %arg7[%c8_123, %c0_124, %c0_125] : memref<9x1x512xf32, #tpu.memory_space<vmem>>, vector<1x1x512xf32>
    %185 = vector.shape_cast %184 : vector<1x1x512xf32> to vector<1x512xf32>
    %186 = vector.broadcast %185 : vector<1x512xf32> to vector<8x512xf32>
    %187 = arith.mulf %183, %186 : vector<8x512xf32>
    %c8_126 = arith.constant 8 : index
    %c0_127 = arith.constant 0 : index
    %c0_128 = arith.constant 0 : index
    %188 = vector.load %arg4[%c8_126, %c0_127, %c0_128] : memref<9x8x8xbf16, #tpu.memory_space<vmem>>, vector<1x8x8xbf16>
    %189 = vector.shape_cast %188 : vector<1x8x8xbf16> to vector<8x8xbf16>
    %190 = arith.truncf %187 : vector<8x512xf32> to vector<8x512xbf16>
    %cst_129 = arith.constant dense<0.000000e+00> : vector<8x512xf32>
    %191 = tpu.matmul %189, %190, %cst_129 {dimension_numbers = #tpu.dot_dimension_numbers<[1], [0], [0], [1], [0, 0, 1, 1], [], []>} : vector<8x8xbf16>, vector<8x512xbf16>, vector<8x512xf32> -> vector<8x512xf32>
    %192 = arith.addf %182, %191 : vector<8x512xf32>
    %cst_130 = arith.constant dense<0.000000e+00> : vector<8xf32>
    %193 = vector.multi_reduction <add>, %192, %cst_130 [1] : vector<8x512xf32> to vector<8xf32>
    %194 = vector.shape_cast %193 : vector<8xf32> to vector<8x1xf32>
    %cst_131 = arith.constant 0.001953125 : f32
    %195 = vector.broadcast %cst_131 : f32 to vector<8x1xf32>
    %196 = arith.mulf %194, %195 : vector<8x1xf32>
    %197 = vector.broadcast %196 : vector<8x1xf32> to vector<8x512xf32>
    %198 = arith.subf %192, %197 : vector<8x512xf32>
    %199 = arith.mulf %198, %198 : vector<8x512xf32>
    %cst_132 = arith.constant dense<0.000000e+00> : vector<8xf32>
    %200 = vector.multi_reduction <add>, %199, %cst_132 [1] : vector<8x512xf32> to vector<8xf32>
    %201 = vector.shape_cast %200 : vector<8xf32> to vector<8x1xf32>
    %cst_133 = arith.constant 0.001953125 : f32
    %202 = vector.broadcast %cst_133 : f32 to vector<8x1xf32>
    %203 = arith.mulf %201, %202 : vector<8x1xf32>
    %cst_134 = arith.constant 9.99999974E-6 : f32
    %204 = vector.broadcast %cst_134 : f32 to vector<8x1xf32>
    %205 = arith.addf %203, %204 : vector<8x1xf32>
    %206 = math.rsqrt %205 : vector<8x1xf32>
    %207 = vector.broadcast %206 : vector<8x1xf32> to vector<8x512xf32>
    %208 = arith.mulf %198, %207 : vector<8x512xf32>
    %c0_135 = arith.constant 0 : index
    %c0_136 = arith.constant 0 : index
    %209 = vector.load %arg5[%c0_135, %c0_136] : memref<8x1xf32, #tpu.memory_space<vmem>>, vector<8x1xf32>
    %210 = vector.broadcast %209 : vector<8x1xf32> to vector<8x512xf32>
    %211 = arith.mulf %208, %210 : vector<8x512xf32>
    %c0_137 = arith.constant 0 : index
    %c0_138 = arith.constant 0 : index
    %212 = vector.load %arg6[%c0_137, %c0_138] : memref<8x1xf32, #tpu.memory_space<vmem>>, vector<8x1xf32>
    %213 = vector.broadcast %212 : vector<8x1xf32> to vector<8x512xf32>
    %214 = arith.addf %211, %213 : vector<8x512xf32>
    %215 = vector.extract_strided_slice %0 {offsets = [0, 0], sizes = [4, 256], strides = [1, 1]} : vector<4x512xf32> to vector<4x256xf32>
    %cst_139 = arith.constant 0.000000e+00 : f32
    %216 = vector.broadcast %cst_139 : f32 to vector<4x256xf32>
    %217 = arith.maximumf %215, %216 : vector<4x256xf32>
    %c0_140 = arith.constant 0 : index
    %c0_141 = arith.constant 0 : index
    %c0_142 = arith.constant 0 : index
    %218 = vector.load %arg8[%c0_140, %c0_141, %c0_142] : memref<2x12x256xf32, #tpu.memory_space<vmem>>, vector<1x4x256xf32>
    %219 = vector.shape_cast %218 : vector<1x4x256xf32> to vector<4x256xf32>
    %220 = vector.shape_cast %217 : vector<4x256xf32> to vector<1x4x256xf32>
    tpu.vector_store %arg8[%c0_140, %c0_141, %c0_142], %220 {strides = array<i32>} : memref<2x12x256xf32, #tpu.memory_space<vmem>>, vector<1x4x256xf32>,
    %221 = vector.extract_strided_slice %214 {offsets = [0, 0], sizes = [8, 256], strides = [1, 1]} : vector<8x512xf32> to vector<8x256xf32>
    %cst_143 = arith.constant 0.000000e+00 : f32
    %222 = vector.broadcast %cst_143 : f32 to vector<8x256xf32>
    %223 = arith.maximumf %221, %222 : vector<8x256xf32>
    %c0_144 = arith.constant 0 : index
    %c4_145 = arith.constant 4 : index
    %c0_146 = arith.constant 0 : index
    %224 = vector.load %arg8[%c0_144, %c4_145, %c0_146] : memref<2x12x256xf32, #tpu.memory_space<vmem>>, vector<1x8x256xf32>
    %225 = vector.shape_cast %224 : vector<1x8x256xf32> to vector<8x256xf32>
    %226 = vector.shape_cast %223 : vector<8x256xf32> to vector<1x8x256xf32>
    tpu.vector_store %arg8[%c0_144, %c4_145, %c0_146], %226 {strides = array<i32>} : memref<2x12x256xf32, #tpu.memory_space<vmem>>, vector<1x8x256xf32>,
    %227 = vector.extract_strided_slice %0 {offsets = [0, 256], sizes = [4, 256], strides = [1, 1]} : vector<4x512xf32> to vector<4x256xf32>
    %cst_147 = arith.constant 0.000000e+00 : f32
    %228 = vector.broadcast %cst_147 : f32 to vector<4x256xf32>
    %229 = arith.maximumf %227, %228 : vector<4x256xf32>
    %c1_148 = arith.constant 1 : index
    %c0_149 = arith.constant 0 : index
    %c0_150 = arith.constant 0 : index
    %230 = vector.load %arg8[%c1_148, %c0_149, %c0_150] : memref<2x12x256xf32, #tpu.memory_space<vmem>>, vector<1x4x256xf32>
    %231 = vector.shape_cast %230 : vector<1x4x256xf32> to vector<4x256xf32>
    %232 = vector.shape_cast %229 : vector<4x256xf32> to vector<1x4x256xf32>
    tpu.vector_store %arg8[%c1_148, %c0_149, %c0_150], %232 {strides = array<i32>} : memref<2x12x256xf32, #tpu.memory_space<vmem>>, vector<1x4x256xf32>,
    %233 = vector.extract_strided_slice %214 {offsets = [0, 256], sizes = [8, 256], strides = [1, 1]} : vector<8x512xf32> to vector<8x256xf32>
    %cst_151 = arith.constant 0.000000e+00 : f32
    %234 = vector.broadcast %cst_151 : f32 to vector<8x256xf32>
    %235 = arith.maximumf %233, %234 : vector<8x256xf32>
    %c1_152 = arith.constant 1 : index
    %c4_153 = arith.constant 4 : index
    %c0_154 = arith.constant 0 : index
    %236 = vector.load %arg8[%c1_152, %c4_153, %c0_154] : memref<2x12x256xf32, #tpu.memory_space<vmem>>, vector<1x8x256xf32>
    %237 = vector.shape_cast %236 : vector<1x8x256xf32> to vector<8x256xf32>
    %238 = vector.shape_cast %235 : vector<8x256xf32> to vector<1x8x256xf32>
    tpu.vector_store %arg8[%c1_152, %c4_153, %c0_154], %238 {strides = array<i32>} : memref<2x12x256xf32, #tpu.memory_space<vmem>>, vector<1x8x256xf32>,
    return
  }
}

</mosaic_0001>

<llo_original>
// kernel: tpu_custom_call.1
$region0: #{tpu_custom_call.1}
  #allocation0 [shape = 'u32[]', space=smem, size = 0x4, offset = 0x4, fixed_abs, tag = 'smem constant byte address 0x4 - core index']
  #allocation1 [shape = 'u32[144,128]{1,0:T(1,128)}', space=vmem, size = 0x12000, scoped, tag = 'internal scratch']
  %s0 = inlined_call_operand.vmem [shape: f32[4,512], index: 0, kind: input, shape index: {}]
  %s1 = inlined_call_operand.vmem [shape: bf16[9,8,4], index: 1, kind: input, shape index: {}]
  %s2 = inlined_call_operand.vmem [shape: f32[8,1], index: 2, kind: input, shape index: {}]
  %s3 = inlined_call_operand.vmem [shape: f32[8,1], index: 3, kind: input, shape index: {}]
  %s4 = inlined_call_operand.vmem [shape: bf16[9,8,8], index: 4, kind: input, shape index: {}]
  %s5 = inlined_call_operand.vmem [shape: f32[8,1], index: 5, kind: input, shape index: {}]
  %s6 = inlined_call_operand.vmem [shape: f32[8,1], index: 6, kind: input, shape index: {}]
  %s7 = inlined_call_operand.vmem [shape: f32[9,1,512], index: 7, kind: input, shape index: {}]
  %s8 = inlined_call_operand.vmem [shape: f32[2,12,256], index: 8, kind: output, shape index: {}]
  %s9 = sld [smem:[#allocation0]]
  $region42: #{tpu_custom_call.1} parent=0
    _
  %s11 = ssub.s32 1, %s9
  %s12 = scalar_select 0, %s11, %s9
  // Predicated region
  $region2: #{tpu_custom_call.1} parent=0 // pred_check
    _
  $region3: #{tpu_custom_call.1} parent=0 // pred_check_branch
    %14 = sbr.rel (0) target = $region5
  $region4: #{tpu_custom_call.1} parent=0 // pred_region
    _
  $region5: #{tpu_custom_call.1} parent=0 // pred_fallthru
    _
  // Predicated region
  $region6: #{tpu_custom_call.1} parent=0 // pred_check
    _
  $region7: #{tpu_custom_call.1} parent=0 // pred_check_branch
    %16 = sbr.rel (0) target = $region9
  $region8: #{tpu_custom_call.1} parent=0 // pred_region
    _
  $region9: #{tpu_custom_call.1} parent=0 // pred_fallthru
    _
  // Predicated region
  $region10: #{tpu_custom_call.1} parent=0 // pred_check
    _
  $region11: #{tpu_custom_call.1} parent=0 // pred_check_branch
    %18 = sbr.rel (0) target = $region13
  $region12: #{tpu_custom_call.1} parent=0 // pred_region
    _
  $region13: #{tpu_custom_call.1} parent=0 // pred_fallthru
    _
  // Predicated region
  $region14: #{tpu_custom_call.1} parent=0 // pred_check
    _
  $region15: #{tpu_custom_call.1} parent=0 // pred_check_branch
    %20 = sbr.rel (0) target = $region17
  $region16: #{tpu_custom_call.1} parent=0 // pred_region
    _
  $region17: #{tpu_custom_call.1} parent=0 // pred_fallthru
    _
  // Predicated region
  $region18: #{tpu_custom_call.1} parent=0 // pred_check
    _
  $region19: #{tpu_custom_call.1} parent=0 // pred_check_branch
    %22 = sbr.rel (0) target = $region21
  $region20: #{tpu_custom_call.1} parent=0 // pred_region
    _
  $region21: #{tpu_custom_call.1} parent=0 // pred_fallthru
    _
  // Predicated region
  $region22: #{tpu_custom_call.1} parent=0 // pred_check
    _
  $region23: #{tpu_custom_call.1} parent=0 // pred_check_branch
    %24 = sbr.rel (0) target = $region25
  $region24: #{tpu_custom_call.1} parent=0 // pred_region
    _
  $region25: #{tpu_custom_call.1} parent=0 // pred_fallthru
    _
  // Predicated region
  $region26: #{tpu_custom_call.1} parent=0 // pred_check
    _
  $region27: #{tpu_custom_call.1} parent=0 // pred_check_branch
    %26 = sbr.rel (0) target = $region29
  $region28: #{tpu_custom_call.1} parent=0 // pred_region
    _
  $region29: #{tpu_custom_call.1} parent=0 // pred_fallthru
    _
  // Predicated region
  $region30: #{tpu_custom_call.1} parent=0 // pred_check
    _
  $region31: #{tpu_custom_call.1} parent=0 // pred_check_branch
    %28 = sbr.rel (0) target = $region33
  $region32: #{tpu_custom_call.1} parent=0 // pred_region
    _
  $region33: #{tpu_custom_call.1} parent=0 // pred_fallthru
    _
  %v30 = vld [vmem:[%s0] sm:$0xff]
  %v31 = vld [vmem:[%s0 + $0x8] sm:$0xff]
  %v34 = vcombine.high %v30, %v30
  %v35 = vcombine.high %v31, %v31
  %38 = vrot.lane.b32.xlu0 %v30, 17
  %v39 = vpop.permute.xlu0 %38
  %40 = vrot.lane.b32.xlu0 %v34, 17
  %v41 = vpop.permute.xlu0 %40
  %42 = vrot.lane.b32.xlu0 %v31, 17
  %v43 = vpop.permute.xlu0 %42
  %44 = vrot.lane.b32.xlu0 %v35, 17
  %v45 = vpop.permute.xlu0 %44
  %v46 = vlaneseq
  %v47 = vand.u32 %v46, 127
  %vm48 = vcmp.lt.s32.totalorder %v47, 17
  %v49 = vsel %vm48, %v43, %v45
  %v50 = vsel %vm48, %v41, %v43
  %v51 = vsel %vm48, %v39, %v41
  %v52 = vsel %vm48, %v45, %v39
  %v53 = vld [vmem:[%s7] sm:$0xf]
  %v55 = vlaneseq
  %v56 = vshrl.u32 %v55, 7
  %v57 = vsub.s32 0, %v56
  %v58 = vrot.slane %v53, %v57
  %v59 = vlaneseq
  %v60 = vshrl.u32 %v59, 7
  %v61 = vsub.s32 1, %v60
  %v62 = vrot.slane %v53, %v61
  %v63 = vlaneseq
  %v64 = vshrl.u32 %v63, 7
  %v65 = vsub.s32 2, %v64
  %v66 = vrot.slane %v53, %v65
  %v67 = vlaneseq
  %v68 = vshrl.u32 %v67, 7
  %v69 = vsub.s32 3, %v68
  %v70 = vrot.slane %v53, %v69
  %v75 = vmul.f32 %v52, %v58
  %v76 = vmul.f32 %v51, %v62
  %v77 = vmul.f32 %v50, %v66
  %v78 = vmul.f32 %v49, %v70
  %v79 = vld [vmem:[%s1] sm:$0xf]
  %v80 = vpack.c.bf16 %v75, %v75
  %v81 = vpack.c.bf16 %v76, %v76
  %v82 = vpack.c.bf16 %v77, %v77
  %v83 = vpack.c.bf16 %v78, %v78
  %84 = vrot.lane.b32.xlu0 %v30, 16
  %v85 = vpop.permute.xlu0 %84
  %86 = vrot.lane.b32.xlu0 %v34, 16
  %v87 = vpop.permute.xlu0 %86
  %88 = vrot.lane.b32.xlu0 %v31, 16
  %v89 = vpop.permute.xlu0 %88
  %90 = vrot.lane.b32.xlu0 %v35, 16
  %v91 = vpop.permute.xlu0 %90
  %vm92 = vcmp.lt.s32.totalorder %v47, 16
  %v93 = vsel %vm92, %v89, %v91
  %v94 = vsel %vm92, %v87, %v89
  %v95 = vsel %vm92, %v85, %v87
  %v96 = vsel %vm92, %v91, %v85
  %s97 = scalar_lea.vmem %s7, 4
  %v98 = vld [vmem:[%s97] sm:$0xf]
  %v100 = vlaneseq
  %v101 = vshrl.u32 %v100, 7
  %v102 = vsub.s32 0, %v101
  %v103 = vrot.slane %v98, %v102
  %v104 = vlaneseq
  %v105 = vshrl.u32 %v104, 7
  %v106 = vsub.s32 1, %v105
  %v107 = vrot.slane %v98, %v106
  %v108 = vlaneseq
  %v109 = vshrl.u32 %v108, 7
  %v110 = vsub.s32 2, %v109
  %v111 = vrot.slane %v98, %v110
  %v112 = vlaneseq
  %v113 = vshrl.u32 %v112, 7
  %v114 = vsub.s32 3, %v113
  %v115 = vrot.slane %v98, %v114
  %v120 = vmul.f32 %v96, %v103
  %v121 = vmul.f32 %v95, %v107
  %v122 = vmul.f32 %v94, %v111
  %v123 = vmul.f32 %v93, %v115
  %s124 = scalar_lea.vmem %s1, 4
  %v125 = vld [vmem:[%s124] sm:$0xf]
  %v126 = vpack.c.bf16 %v120, %v120
  %v127 = vpack.c.bf16 %v121, %v121
  %v128 = vpack.c.bf16 %v122, %v122
  %v129 = vpack.c.bf16 %v123, %v123
  %vm130 = vcmask 31744
  %v132 = vsel %vm130, %v125, 0
  %vm134 = vcmask 1041408
  %v136 = vsel %vm134, %v126, 0
  %v139 = vsel %vm134, %v127, 0
  %v142 = vsel %vm134, %v128, 0
  %v145 = vsel %vm134, %v129, 0
  %147 = vmatprep.subr.bf16.mxu0 0
  %148 = vmatpush1.bf16.msra.mxu0 0
  %149 = vmatprep.subr.bf16.mxu0 0
  %150 = vmatpush1.bf16.msra.mxu0 0
  %151 = vmatprep.subr.bf16.mxu0 0
  %152 = vmatpush1.bf16.msra.mxu0 0
  %153 = vmatprep.subr.bf16.mxu0 0
  %154 = vmatpush1.bf16.msra.mxu0 0
  %155 = vmatprep.subr.bf16.mxu0 0
  %156 = vmatpush1.bf16.msra.mxu0 0
  %157 = vmatprep.subr.bf16.mxu0 0
  %158 = vmatpush1.bf16.msra.mxu0 0
  %159 = vmatprep.subr.bf16.mxu0 0
  %160 = vmatpush1.bf16.msra.mxu0 0
  %161 = vmatprep.subr.bf16.mxu0 %v139
  %162 = vmatpush1.bf16.msra.mxu0 %v136
  %163 = vmatprep.subr.bf16.mxu0 0
  %164 = vmatpush2.bf16.msra.mxu0 0
  %165 = vmatprep.subr.bf16.mxu0 0
  %166 = vmatpush2.bf16.msra.mxu0 0
  %167 = vmatprep.subr.bf16.mxu0 0
  %168 = vmatpush2.bf16.msra.mxu0 0
  %169 = vmatprep.subr.bf16.mxu0 0
  %170 = vmatpush2.bf16.msra.mxu0 0
  %171 = vmatprep.subr.bf16.mxu0 0
  %172 = vmatpush2.bf16.msra.mxu0 0
  %173 = vmatprep.subr.bf16.mxu0 0
  %174 = vmatpush2.bf16.msra.mxu0 0
  %175 = vmatprep.subr.bf16.mxu0 0
  %176 = vmatpush2.bf16.msra.mxu0 0
  %177 = vmatprep.subr.bf16.mxu0 0
  %178 = vmatpush2.bf16.msra.mxu0 0
  %179 = vmatprep.mubr.bf16.mxu0 0
  %180 = vmatmul.mubr.bf16.gmra.mxu0 %v132
  %v181 = vpop.f32.mrf.mxu0
  %v182 = vadd.f32 0.0, %v181
  %v183 = vpop.f32.mrf.mxu0
  %v184 = vadd.f32 0.0, %v183
  %v185 = vpop.f32.mrf.mxu0
  %v186 = vpop.f32.mrf.mxu0
  %187 = vdwg.mxu0
  %188 = vmatprep.subr.bf16.mxu0 0
  %189 = vmatpush1.bf16.msra.mxu0 0
  %190 = vmatprep.subr.bf16.mxu0 0
  %191 = vmatpush1.bf16.msra.mxu0 0
  %192 = vmatprep.subr.bf16.mxu0 0
  %193 = vmatpush1.bf16.msra.mxu0 0
  %194 = vmatprep.subr.bf16.mxu0 0
  %195 = vmatpush1.bf16.msra.mxu0 0
  %196 = vmatprep.subr.bf16.mxu0 0
  %197 = vmatpush1.bf16.msra.mxu0 0
  %198 = vmatprep.subr.bf16.mxu0 0
  %199 = vmatpush1.bf16.msra.mxu0 0
  %200 = vmatprep.subr.bf16.mxu0 0
  %201 = vmatpush1.bf16.msra.mxu0 0
  %202 = vmatprep.subr.bf16.mxu0 %v145
  %203 = vmatpush1.bf16.msra.mxu0 %v142
  %204 = vmatprep.subr.bf16.mxu0 0
  %205 = vmatpush2.bf16.msra.mxu0 0
  %206 = vmatprep.subr.bf16.mxu0 0
  %207 = vmatpush2.bf16.msra.mxu0 0
  %208 = vmatprep.subr.bf16.mxu0 0
  %209 = vmatpush2.bf16.msra.mxu0 0
  %210 = vmatprep.subr.bf16.mxu0 0
  %211 = vmatpush2.bf16.msra.mxu0 0
  %212 = vmatprep.subr.bf16.mxu0 0
  %213 = vmatpush2.bf16.msra.mxu0 0
  %214 = vmatprep.subr.bf16.mxu0 0
  %215 = vmatpush2.bf16.msra.mxu0 0
  %216 = vmatprep.subr.bf16.mxu0 0
  %217 = vmatpush2.bf16.msra.mxu0 0
  %218 = vmatprep.subr.bf16.mxu0 0
  %219 = vmatpush2.bf16.msra.mxu0 0
  %220 = vmatprep.mubr.bf16.mxu0 0
  %221 = vmatmul.mubr.bf16.gmra.mxu0 %v132
  %v222 = vpop.f32.mrf.mxu0
  %v223 = vadd.f32 0.0, %v222
  %v224 = vpop.f32.mrf.mxu0
  %v225 = vadd.f32 0.0, %v224
  %v226 = vpop.f32.mrf.mxu0
  %v227 = vpop.f32.mrf.mxu0
  %228 = vdwg.mxu0
  %v230 = vsel %vm130, %v79, 0
  %v233 = vsel %vm134, %v80, 0
  %v236 = vsel %vm134, %v81, 0
  %v239 = vsel %vm134, %v82, 0
  %v242 = vsel %vm134, %v83, 0
  %244 = vmatprep.subr.bf16.mxu0 0
  %245 = vmatpush1.bf16.msra.mxu0 0
  %246 = vmatprep.subr.bf16.mxu0 0
  %247 = vmatpush1.bf16.msra.mxu0 0
  %248 = vmatprep.subr.bf16.mxu0 0
  %249 = vmatpush1.bf16.msra.mxu0 0
  %250 = vmatprep.subr.bf16.mxu0 0
  %251 = vmatpush1.bf16.msra.mxu0 0
  %252 = vmatprep.subr.bf16.mxu0 0
  %253 = vmatpush1.bf16.msra.mxu0 0
  %254 = vmatprep.subr.bf16.mxu0 0
  %255 = vmatpush1.bf16.msra.mxu0 0
  %256 = vmatprep.subr.bf16.mxu0 0
  %257 = vmatpush1.bf16.msra.mxu0 0
  %258 = vmatprep.subr.bf16.mxu0 %v236
  %259 = vmatpush1.bf16.msra.mxu0 %v233
  %260 = vmatprep.subr.bf16.mxu0 0
  %261 = vmatpush2.bf16.msra.mxu0 0
  %262 = vmatprep.subr.bf16.mxu0 0
  %263 = vmatpush2.bf16.msra.mxu0 0
  %264 = vmatprep.subr.bf16.mxu0 0
  %265 = vmatpush2.bf16.msra.mxu0 0
  %266 = vmatprep.subr.bf16.mxu0 0
  %267 = vmatpush2.bf16.msra.mxu0 0
  %268 = vmatprep.subr.bf16.mxu0 0
  %269 = vmatpush2.bf16.msra.mxu0 0
  %270 = vmatprep.subr.bf16.mxu0 0
  %271 = vmatpush2.bf16.msra.mxu0 0
  %272 = vmatprep.subr.bf16.mxu0 0
  %273 = vmatpush2.bf16.msra.mxu0 0
  %274 = vmatprep.subr.bf16.mxu0 0
  %275 = vmatpush2.bf16.msra.mxu0 0
  %276 = vmatprep.mubr.bf16.mxu0 0
  %277 = vmatmul.mubr.bf16.gmra.mxu0 %v230
  %v278 = vpop.f32.mrf.mxu0
  %v279 = vadd.f32 %v182, %v278
  %v280 = vpop.f32.mrf.mxu0
  %v281 = vadd.f32 %v184, %v280
  %v282 = vpop.f32.mrf.mxu0
  %v283 = vpop.f32.mrf.mxu0
  %284 = vdwg.mxu0
  %285 = vmatprep.subr.bf16.mxu0 0
  %286 = vmatpush1.bf16.msra.mxu0 0
  %287 = vmatprep.subr.bf16.mxu0 0
  %288 = vmatpush1.bf16.msra.mxu0 0
  %289 = vmatprep.subr.bf16.mxu0 0
  %290 = vmatpush1.bf16.msra.mxu0 0
  %291 = vmatprep.subr.bf16.mxu0 0
  %292 = vmatpush1.bf16.msra.mxu0 0
  %293 = vmatprep.subr.bf16.mxu0 0
  %294 = vmatpush1.bf16.msra.mxu0 0
  %295 = vmatprep.subr.bf16.mxu0 0
  %296 = vmatpush1.bf16.msra.mxu0 0
  %297 = vmatprep.subr.bf16.mxu0 0
  %298 = vmatpush1.bf16.msra.mxu0 0
  %299 = vmatprep.subr.bf16.mxu0 %v242
  %300 = vmatpush1.bf16.msra.mxu0 %v239
  %301 = vmatprep.subr.bf16.mxu0 0
  %302 = vmatpush2.bf16.msra.mxu0 0
  %303 = vmatprep.subr.bf16.mxu0 0
  %304 = vmatpush2.bf16.msra.mxu0 0
  %305 = vmatprep.subr.bf16.mxu0 0
  %306 = vmatpush2.bf16.msra.mxu0 0
  %307 = vmatprep.subr.bf16.mxu0 0
  %308 = vmatpush2.bf16.msra.mxu0 0
  %309 = vmatprep.subr.bf16.mxu0 0
  %310 = vmatpush2.bf16.msra.mxu0 0
  %311 = vmatprep.subr.bf16.mxu0 0
  %312 = vmatpush2.bf16.msra.mxu0 0
  %313 = vmatprep.subr.bf16.mxu0 0
  %314 = vmatpush2.bf16.msra.mxu0 0
  %315 = vmatprep.subr.bf16.mxu0 0
  %316 = vmatpush2.bf16.msra.mxu0 0
  %317 = vmatprep.mubr.bf16.mxu0 0
  %318 = vmatmul.mubr.bf16.gmra.mxu0 %v230
  %v319 = vpop.f32.mrf.mxu0
  %v320 = vadd.f32 %v223, %v319
  %v321 = vpop.f32.mrf.mxu0
  %v322 = vadd.f32 %v225, %v321
  %v323 = vpop.f32.mrf.mxu0
  %v324 = vpop.f32.mrf.mxu0
  %325 = vdwg.mxu0
  %326 = vrot.lane.b32.xlu0 %v30, 15
  %v327 = vpop.permute.xlu0 %326
  %328 = vrot.lane.b32.xlu0 %v34, 15
  %v329 = vpop.permute.xlu0 %328
  %330 = vrot.lane.b32.xlu0 %v31, 15
  %v331 = vpop.permute.xlu0 %330
  %332 = vrot.lane.b32.xlu0 %v35, 15
  %v333 = vpop.permute.xlu0 %332
  %vm334 = vcmp.lt.s32.totalorder %v47, 15
  %v335 = vsel %vm334, %v331, %v333
  %v336 = vsel %vm334, %v329, %v331
  %v337 = vsel %vm334, %v327, %v329
  %v338 = vsel %vm334, %v333, %v327
  %s339 = scalar_lea.vmem %s7, 8
  %v340 = vld [vmem:[%s339] sm:$0xf]
  %v342 = vlaneseq
  %v343 = vshrl.u32 %v342, 7
  %v344 = vsub.s32 0, %v343
  %v345 = vrot.slane %v340, %v344
  %v346 = vlaneseq
  %v347 = vshrl.u32 %v346, 7
  %v348 = vsub.s32 1, %v347
  %v349 = vrot.slane %v340, %v348
  %v350 = vlaneseq
  %v351 = vshrl.u32 %v350, 7
  %v352 = vsub.s32 2, %v351
  %v353 = vrot.slane %v340, %v352
  %v354 = vlaneseq
  %v355 = vshrl.u32 %v354, 7
  %v356 = vsub.s32 3, %v355
  %v357 = vrot.slane %v340, %v356
  %v362 = vmul.f32 %v338, %v345
  %v363 = vmul.f32 %v337, %v349
  %v364 = vmul.f32 %v336, %v353
  %v365 = vmul.f32 %v335, %v357
  %s366 = scalar_lea.vmem %s1, 8
  %v367 = vld [vmem:[%s366] sm:$0xf]
  %v368 = vpack.c.bf16 %v362, %v362
  %v369 = vpack.c.bf16 %v363, %v363
  %v370 = vpack.c.bf16 %v364, %v364
  %v371 = vpack.c.bf16 %v365, %v365
  %v373 = vsel %vm130, %v367, 0
  %v376 = vsel %vm134, %v368, 0
  %v379 = vsel %vm134, %v369, 0
  %v382 = vsel %vm134, %v370, 0
  %v385 = vsel %vm134, %v371, 0
  %387 = vmatprep.subr.bf16.mxu0 0
  %388 = vmatpush1.bf16.msra.mxu0 0
  %389 = vmatprep.subr.bf16.mxu0 0
  %390 = vmatpush1.bf16.msra.mxu0 0
  %391 = vmatprep.subr.bf16.mxu0 0
  %392 = vmatpush1.bf16.msra.mxu0 0
  %393 = vmatprep.subr.bf16.mxu0 0
  %394 = vmatpush1.bf16.msra.mxu0 0
  %395 = vmatprep.subr.bf16.mxu0 0
  %396 = vmatpush1.bf16.msra.mxu0 0
  %397 = vmatprep.subr.bf16.mxu0 0
  %398 = vmatpush1.bf16.msra.mxu0 0
  %399 = vmatprep.subr.bf16.mxu0 0
  %400 = vmatpush1.bf16.msra.mxu0 0
  %401 = vmatprep.subr.bf16.mxu0 %v379
  %402 = vmatpush1.bf16.msra.mxu0 %v376
  %403 = vmatprep.subr.bf16.mxu0 0
  %404 = vmatpush2.bf16.msra.mxu0 0
  %405 = vmatprep.subr.bf16.mxu0 0
  %406 = vmatpush2.bf16.msra.mxu0 0
  %407 = vmatprep.subr.bf16.mxu0 0
  %408 = vmatpush2.bf16.msra.mxu0 0
  %409 = vmatprep.subr.bf16.mxu0 0
  %410 = vmatpush2.bf16.msra.mxu0 0
  %411 = vmatprep.subr.bf16.mxu0 0
  %412 = vmatpush2.bf16.msra.mxu0 0
  %413 = vmatprep.subr.bf16.mxu0 0
  %414 = vmatpush2.bf16.msra.mxu0 0
  %415 = vmatprep.subr.bf16.mxu0 0
  %416 = vmatpush2.bf16.msra.mxu0 0
  %417 = vmatprep.subr.bf16.mxu0 0
  %418 = vmatpush2.bf16.msra.mxu0 0
  %419 = vmatprep.mubr.bf16.mxu0 0
  %420 = vmatmul.mubr.bf16.gmra.mxu0 %v373
  %v421 = vpop.f32.mrf.mxu0
  %v422 = vadd.f32 0.0, %v421
  %v423 = vpop.f32.mrf.mxu0
  %v424 = vadd.f32 0.0, %v423
  %v425 = vpop.f32.mrf.mxu0
  %v426 = vpop.f32.mrf.mxu0
  %427 = vdwg.mxu0
  %428 = vmatprep.subr.bf16.mxu0 0
  %429 = vmatpush1.bf16.msra.mxu0 0
  %430 = vmatprep.subr.bf16.mxu0 0
  %431 = vmatpush1.bf16.msra.mxu0 0
  %432 = vmatprep.subr.bf16.mxu0 0
  %433 = vmatpush1.bf16.msra.mxu0 0
  %434 = vmatprep.subr.bf16.mxu0 0
  %435 = vmatpush1.bf16.msra.mxu0 0
  %436 = vmatprep.subr.bf16.mxu0 0
  %437 = vmatpush1.bf16.msra.mxu0 0
  %438 = vmatprep.subr.bf16.mxu0 0
  %439 = vmatpush1.bf16.msra.mxu0 0
  %440 = vmatprep.subr.bf16.mxu0 0
  %441 = vmatpush1.bf16.msra.mxu0 0
  %442 = vmatprep.subr.bf16.mxu0 %v385
  %443 = vmatpush1.bf16.msra.mxu0 %v382
  %444 = vmatprep.subr.bf16.mxu0 0
  %445 = vmatpush2.bf16.msra.mxu0 0
  %446 = vmatprep.subr.bf16.mxu0 0
  %447 = vmatpush2.bf16.msra.mxu0 0
  %448 = vmatprep.subr.bf16.mxu0 0
  %449 = vmatpush2.bf16.msra.mxu0 0
  %450 = vmatprep.subr.bf16.mxu0 0
  %451 = vmatpush2.bf16.msra.mxu0 0
  %452 = vmatprep.subr.bf16.mxu0 0
  %453 = vmatpush2.bf16.msra.mxu0 0
  %454 = vmatprep.subr.bf16.mxu0 0
  %455 = vmatpush2.bf16.msra.mxu0 0
  %456 = vmatprep.subr.bf16.mxu0 0
  %457 = vmatpush2.bf16.msra.mxu0 0
  %458 = vmatprep.subr.bf16.mxu0 0
  %459 = vmatpush2.bf16.msra.mxu0 0
  %460 = vmatprep.mubr.bf16.mxu0 0
  %461 = vmatmul.mubr.bf16.gmra.mxu0 %v373
  %v462 = vpop.f32.mrf.mxu0
  %v463 = vadd.f32 0.0, %v462
  %v464 = vpop.f32.mrf.mxu0
  %v465 = vadd.f32 0.0, %v464
  %v466 = vpop.f32.mrf.mxu0
  %v467 = vpop.f32.mrf.mxu0
  %468 = vdwg.mxu0
  %v469 = vadd.f32 %v279, %v422
  %v470 = vadd.f32 %v281, %v424
  %v471 = vadd.f32 %v320, %v463
  %v472 = vadd.f32 %v322, %v465
  %473 = vrot.lane.b32.xlu0 %v30, 1
  %v474 = vpop.permute.xlu0 %473
  %475 = vrot.lane.b32.xlu0 %v34, 1
  %v476 = vpop.permute.xlu0 %475
  %477 = vrot.lane.b32.xlu0 %v31, 1
  %v478 = vpop.permute.xlu0 %477
  %479 = vrot.lane.b32.xlu0 %v35, 1
  %v480 = vpop.permute.xlu0 %479
  %vm481 = vcmp.lt.s32.totalorder %v47, 1
  %v482 = vsel %vm481, %v478, %v480
  %v483 = vsel %vm481, %v476, %v478
  %v484 = vsel %vm481, %v474, %v476
  %v485 = vsel %vm481, %v480, %v474
  %s486 = scalar_lea.vmem %s7, 12
  %v487 = vld [vmem:[%s486] sm:$0xf]
  %v489 = vlaneseq
  %v490 = vshrl.u32 %v489, 7
  %v491 = vsub.s32 0, %v490
  %v492 = vrot.slane %v487, %v491
  %v493 = vlaneseq
  %v494 = vshrl.u32 %v493, 7
  %v495 = vsub.s32 1, %v494
  %v496 = vrot.slane %v487, %v495
  %v497 = vlaneseq
  %v498 = vshrl.u32 %v497, 7
  %v499 = vsub.s32 2, %v498
  %v500 = vrot.slane %v487, %v499
  %v501 = vlaneseq
  %v502 = vshrl.u32 %v501, 7
  %v503 = vsub.s32 3, %v502
  %v504 = vrot.slane %v487, %v503
  %v509 = vmul.f32 %v485, %v492
  %v510 = vmul.f32 %v484, %v496
  %v511 = vmul.f32 %v483, %v500
  %v512 = vmul.f32 %v482, %v504
  %s513 = scalar_lea.vmem %s1, 12
  %v514 = vld [vmem:[%s513] sm:$0xf]
  %v515 = vpack.c.bf16 %v509, %v509
  %v516 = vpack.c.bf16 %v510, %v510
  %v517 = vpack.c.bf16 %v511, %v511
  %v518 = vpack.c.bf16 %v512, %v512
  %v520 = vsel %vm130, %v514, 0
  %v523 = vsel %vm134, %v515, 0
  %v526 = vsel %vm134, %v516, 0
  %v529 = vsel %vm134, %v517, 0
  %v532 = vsel %vm134, %v518, 0
  %534 = vmatprep.subr.bf16.mxu0 0
  %535 = vmatpush1.bf16.msra.mxu0 0
  %536 = vmatprep.subr.bf16.mxu0 0
  %537 = vmatpush1.bf16.msra.mxu0 0
  %538 = vmatprep.subr.bf16.mxu0 0
  %539 = vmatpush1.bf16.msra.mxu0 0
  %540 = vmatprep.subr.bf16.mxu0 0
  %541 = vmatpush1.bf16.msra.mxu0 0
  %542 = vmatprep.subr.bf16.mxu0 0
  %543 = vmatpush1.bf16.msra.mxu0 0
  %544 = vmatprep.subr.bf16.mxu0 0
  %545 = vmatpush1.bf16.msra.mxu0 0
  %546 = vmatprep.subr.bf16.mxu0 0
  %547 = vmatpush1.bf16.msra.mxu0 0
  %548 = vmatprep.subr.bf16.mxu0 %v526
  %549 = vmatpush1.bf16.msra.mxu0 %v523
  %550 = vmatprep.subr.bf16.mxu0 0
  %551 = vmatpush2.bf16.msra.mxu0 0
  %552 = vmatprep.subr.bf16.mxu0 0
  %553 = vmatpush2.bf16.msra.mxu0 0
  %554 = vmatprep.subr.bf16.mxu0 0
  %555 = vmatpush2.bf16.msra.mxu0 0
  %556 = vmatprep.subr.bf16.mxu0 0
  %557 = vmatpush2.bf16.msra.mxu0 0
  %558 = vmatprep.subr.bf16.mxu0 0
  %559 = vmatpush2.bf16.msra.mxu0 0
  %560 = vmatprep.subr.bf16.mxu0 0
  %561 = vmatpush2.bf16.msra.mxu0 0
  %562 = vmatprep.subr.bf16.mxu0 0
  %563 = vmatpush2.bf16.msra.mxu0 0
  %564 = vmatprep.subr.bf16.mxu0 0
  %565 = vmatpush2.bf16.msra.mxu0 0
  %566 = vmatprep.mubr.bf16.mxu0 0
  %567 = vmatmul.mubr.bf16.gmra.mxu0 %v520
  %v568 = vpop.f32.mrf.mxu0
  %v569 = vadd.f32 0.0, %v568
  %v570 = vpop.f32.mrf.mxu0
  %v571 = vadd.f32 0.0, %v570
  %v572 = vpop.f32.mrf.mxu0
  %v573 = vpop.f32.mrf.mxu0
  %574 = vdwg.mxu0
  %575 = vmatprep.subr.bf16.mxu0 0
  %576 = vmatpush1.bf16.msra.mxu0 0
  %577 = vmatprep.subr.bf16.mxu0 0
  %578 = vmatpush1.bf16.msra.mxu0 0
  %579 = vmatprep.subr.bf16.mxu0 0
  %580 = vmatpush1.bf16.msra.mxu0 0
  %581 = vmatprep.subr.bf16.mxu0 0
  %582 = vmatpush1.bf16.msra.mxu0 0
  %583 = vmatprep.subr.bf16.mxu0 0
  %584 = vmatpush1.bf16.msra.mxu0 0
  %585 = vmatprep.subr.bf16.mxu0 0
  %586 = vmatpush1.bf16.msra.mxu0 0
  %587 = vmatprep.subr.bf16.mxu0 0
  %588 = vmatpush1.bf16.msra.mxu0 0
  %589 = vmatprep.subr.bf16.mxu0 %v532
  %590 = vmatpush1.bf16.msra.mxu0 %v529
  %591 = vmatprep.subr.bf16.mxu0 0
  %592 = vmatpush2.bf16.msra.mxu0 0
  %593 = vmatprep.subr.bf16.mxu0 0
  %594 = vmatpush2.bf16.msra.mxu0 0
  %595 = vmatprep.subr.bf16.mxu0 0
  %596 = vmatpush2.bf16.msra.mxu0 0
  %597 = vmatprep.subr.bf16.mxu0 0
  %598 = vmatpush2.bf16.msra.mxu0 0
  %599 = vmatprep.subr.bf16.mxu0 0
  %600 = vmatpush2.bf16.msra.mxu0 0
  %601 = vmatprep.subr.bf16.mxu0 0
  %602 = vmatpush2.bf16.msra.mxu0 0
  %603 = vmatprep.subr.bf16.mxu0 0
  %604 = vmatpush2.bf16.msra.mxu0 0
  %605 = vmatprep.subr.bf16.mxu0 0
  %606 = vmatpush2.bf16.msra.mxu0 0
  %607 = vmatprep.mubr.bf16.mxu0 0
  %608 = vmatmul.mubr.bf16.gmra.mxu0 %v520
  %v609 = vpop.f32.mrf.mxu0
  %v610 = vadd.f32 0.0, %v609
  %v611 = vpop.f32.mrf.mxu0
  %v612 = vadd.f32 0.0, %v611
  %v613 = vpop.f32.mrf.mxu0
  %v614 = vpop.f32.mrf.mxu0
  %615 = vdwg.mxu0
  %v616 = vadd.f32 %v469, %v569
  %v617 = vadd.f32 %v470, %v571
  %v618 = vadd.f32 %v471, %v610
  %v619 = vadd.f32 %v472, %v612
  %s620 = scalar_lea.vmem %s1, 16
  %v621 = vld [vmem:[%s620] sm:$0xf]
  %v622 = vpack.c.bf16 %v30, %v30
  %v623 = vpack.c.bf16 %v34, %v34
  %v624 = vpack.c.bf16 %v31, %v31
  %v625 = vpack.c.bf16 %v35, %v35
  %v627 = vsel %vm130, %v621, 0
  %v630 = vsel %vm134, %v622, 0
  %v633 = vsel %vm134, %v623, 0
  %v636 = vsel %vm134, %v624, 0
  %v639 = vsel %vm134, %v625, 0
  %641 = vmatprep.subr.bf16.mxu0 0
  %642 = vmatpush1.bf16.msra.mxu0 0
  %643 = vmatprep.subr.bf16.mxu0 0
  %644 = vmatpush1.bf16.msra.mxu0 0
  %645 = vmatprep.subr.bf16.mxu0 0
  %646 = vmatpush1.bf16.msra.mxu0 0
  %647 = vmatprep.subr.bf16.mxu0 0
  %648 = vmatpush1.bf16.msra.mxu0 0
  %649 = vmatprep.subr.bf16.mxu0 0
  %650 = vmatpush1.bf16.msra.mxu0 0
  %651 = vmatprep.subr.bf16.mxu0 0
  %652 = vmatpush1.bf16.msra.mxu0 0
  %653 = vmatprep.subr.bf16.mxu0 0
  %654 = vmatpush1.bf16.msra.mxu0 0
  %655 = vmatprep.subr.bf16.mxu0 %v633
  %656 = vmatpush1.bf16.msra.mxu0 %v630
  %657 = vmatprep.subr.bf16.mxu0 0
  %658 = vmatpush2.bf16.msra.mxu0 0
  %659 = vmatprep.subr.bf16.mxu0 0
  %660 = vmatpush2.bf16.msra.mxu0 0
  %661 = vmatprep.subr.bf16.mxu0 0
  %662 = vmatpush2.bf16.msra.mxu0 0
  %663 = vmatprep.subr.bf16.mxu0 0
  %664 = vmatpush2.bf16.msra.mxu0 0
  %665 = vmatprep.subr.bf16.mxu0 0
  %666 = vmatpush2.bf16.msra.mxu0 0
  %667 = vmatprep.subr.bf16.mxu0 0
  %668 = vmatpush2.bf16.msra.mxu0 0
  %669 = vmatprep.subr.bf16.mxu0 0
  %670 = vmatpush2.bf16.msra.mxu0 0
  %671 = vmatprep.subr.bf16.mxu0 0
  %672 = vmatpush2.bf16.msra.mxu0 0
  %673 = vmatprep.mubr.bf16.mxu0 0
  %674 = vmatmul.mubr.bf16.gmra.mxu0 %v627
  %v675 = vpop.f32.mrf.mxu0
  %v676 = vadd.f32 0.0, %v675
  %v677 = vpop.f32.mrf.mxu0
  %v678 = vadd.f32 0.0, %v677
  %v679 = vpop.f32.mrf.mxu0
  %v680 = vpop.f32.mrf.mxu0
  %681 = vdwg.mxu0
  %682 = vmatprep.subr.bf16.mxu0 0
  %683 = vmatpush1.bf16.msra.mxu0 0
  %684 = vmatprep.subr.bf16.mxu0 0
  %685 = vmatpush1.bf16.msra.mxu0 0
  %686 = vmatprep.subr.bf16.mxu0 0
  %687 = vmatpush1.bf16.msra.mxu0 0
  %688 = vmatprep.subr.bf16.mxu0 0
  %689 = vmatpush1.bf16.msra.mxu0 0
  %690 = vmatprep.subr.bf16.mxu0 0
  %691 = vmatpush1.bf16.msra.mxu0 0
  %692 = vmatprep.subr.bf16.mxu0 0
  %693 = vmatpush1.bf16.msra.mxu0 0
  %694 = vmatprep.subr.bf16.mxu0 0
  %695 = vmatpush1.bf16.msra.mxu0 0
  %696 = vmatprep.subr.bf16.mxu0 %v639
  %697 = vmatpush1.bf16.msra.mxu0 %v636
  %698 = vmatprep.subr.bf16.mxu0 0
  %699 = vmatpush2.bf16.msra.mxu0 0
  %700 = vmatprep.subr.bf16.mxu0 0
  %701 = vmatpush2.bf16.msra.mxu0 0
  %702 = vmatprep.subr.bf16.mxu0 0
  %703 = vmatpush2.bf16.msra.mxu0 0
  %704 = vmatprep.subr.bf16.mxu0 0
  %705 = vmatpush2.bf16.msra.mxu0 0
  %706 = vmatprep.subr.bf16.mxu0 0
  %707 = vmatpush2.bf16.msra.mxu0 0
  %708 = vmatprep.subr.bf16.mxu0 0
  %709 = vmatpush2.bf16.msra.mxu0 0
  %710 = vmatprep.subr.bf16.mxu0 0
  %711 = vmatpush2.bf16.msra.mxu0 0
  %712 = vmatprep.subr.bf16.mxu0 0
  %713 = vmatpush2.bf16.msra.mxu0 0
  %714 = vmatprep.mubr.bf16.mxu0 0
  %715 = vmatmul.mubr.bf16.gmra.mxu0 %v627
  %v716 = vpop.f32.mrf.mxu0
  %v717 = vadd.f32 0.0, %v716
  %v718 = vpop.f32.mrf.mxu0
  %v719 = vadd.f32 0.0, %v718
  %v720 = vpop.f32.mrf.mxu0
  %v721 = vpop.f32.mrf.mxu0
  %722 = vdwg.mxu0
  %v723 = vadd.f32 %v616, %v676
  %v724 = vadd.f32 %v617, %v678
  %v725 = vadd.f32 %v618, %v717
  %v726 = vadd.f32 %v619, %v719
  %727 = vrot.lane.b32.xlu0 %v30, 127
  %v728 = vpop.permute.xlu0 %727
  %729 = vrot.lane.b32.xlu0 %v34, 127
  %v730 = vpop.permute.xlu0 %729
  %731 = vrot.lane.b32.xlu0 %v31, 127
  %v732 = vpop.permute.xlu0 %731
  %733 = vrot.lane.b32.xlu0 %v35, 127
  %v734 = vpop.permute.xlu0 %733
  %vm735 = vcmp.lt.s32.totalorder %v47, 127
  %v736 = vsel %vm735, %v732, %v734
  %v737 = vsel %vm735, %v730, %v732
  %v738 = vsel %vm735, %v728, %v730
  %v739 = vsel %vm735, %v734, %v728
  %s740 = scalar_lea.vmem %s7, 20
  %v741 = vld [vmem:[%s740] sm:$0xf]
  %v743 = vlaneseq
  %v744 = vshrl.u32 %v743, 7
  %v745 = vsub.s32 0, %v744
  %v746 = vrot.slane %v741, %v745
  %v747 = vlaneseq
  %v748 = vshrl.u32 %v747, 7
  %v749 = vsub.s32 1, %v748
  %v750 = vrot.slane %v741, %v749
  %v751 = vlaneseq
  %v752 = vshrl.u32 %v751, 7
  %v753 = vsub.s32 2, %v752
  %v754 = vrot.slane %v741, %v753
  %v755 = vlaneseq
  %v756 = vshrl.u32 %v755, 7
  %v757 = vsub.s32 3, %v756
  %v758 = vrot.slane %v741, %v757
  %v763 = vmul.f32 %v738, %v746
  %v764 = vmul.f32 %v737, %v750
  %v765 = vmul.f32 %v736, %v754
  %v766 = vmul.f32 %v739, %v758
  %s767 = scalar_lea.vmem %s1, 20
  %v768 = vld [vmem:[%s767] sm:$0xf]
  %v769 = vpack.c.bf16 %v763, %v763
  %v770 = vpack.c.bf16 %v764, %v764
  %v771 = vpack.c.bf16 %v765, %v765
  %v772 = vpack.c.bf16 %v766, %v766
  %v774 = vsel %vm130, %v768, 0
  %v777 = vsel %vm134, %v769, 0
  %v780 = vsel %vm134, %v770, 0
  %v783 = vsel %vm134, %v771, 0
  %v786 = vsel %vm134, %v772, 0
  %788 = vmatprep.subr.bf16.mxu0 0
  %789 = vmatpush1.bf16.msra.mxu0 0
  %790 = vmatprep.subr.bf16.mxu0 0
  %791 = vmatpush1.bf16.msra.mxu0 0
  %792 = vmatprep.subr.bf16.mxu0 0
  %793 = vmatpush1.bf16.msra.mxu0 0
  %794 = vmatprep.subr.bf16.mxu0 0
  %795 = vmatpush1.bf16.msra.mxu0 0
  %796 = vmatprep.subr.bf16.mxu0 0
  %797 = vmatpush1.bf16.msra.mxu0 0
  %798 = vmatprep.subr.bf16.mxu0 0
  %799 = vmatpush1.bf16.msra.mxu0 0
  %800 = vmatprep.subr.bf16.mxu0 0
  %801 = vmatpush1.bf16.msra.mxu0 0
  %802 = vmatprep.subr.bf16.mxu0 %v780
  %803 = vmatpush1.bf16.msra.mxu0 %v777
  %804 = vmatprep.subr.bf16.mxu0 0
  %805 = vmatpush2.bf16.msra.mxu0 0
  %806 = vmatprep.subr.bf16.mxu0 0
  %807 = vmatpush2.bf16.msra.mxu0 0
  %808 = vmatprep.subr.bf16.mxu0 0
  %809 = vmatpush2.bf16.msra.mxu0 0
  %810 = vmatprep.subr.bf16.mxu0 0
  %811 = vmatpush2.bf16.msra.mxu0 0
  %812 = vmatprep.subr.bf16.mxu0 0
  %813 = vmatpush2.bf16.msra.mxu0 0
  %814 = vmatprep.subr.bf16.mxu0 0
  %815 = vmatpush2.bf16.msra.mxu0 0
  %816 = vmatprep.subr.bf16.mxu0 0
  %817 = vmatpush2.bf16.msra.mxu0 0
  %818 = vmatprep.subr.bf16.mxu0 0
  %819 = vmatpush2.bf16.msra.mxu0 0
  %820 = vmatprep.mubr.bf16.mxu0 0
  %821 = vmatmul.mubr.bf16.gmra.mxu0 %v774
  %v822 = vpop.f32.mrf.mxu0
  %v823 = vadd.f32 0.0, %v822
  %v824 = vpop.f32.mrf.mxu0
  %v825 = vadd.f32 0.0, %v824
  %v826 = vpop.f32.mrf.mxu0
  %v827 = vpop.f32.mrf.mxu0
  %828 = vdwg.mxu0
  %829 = vmatprep.subr.bf16.mxu0 0
  %830 = vmatpush1.bf16.msra.mxu0 0
  %831 = vmatprep.subr.bf16.mxu0 0
  %832 = vmatpush1.bf16.msra.mxu0 0
  %833 = vmatprep.subr.bf16.mxu0 0
  %834 = vmatpush1.bf16.msra.mxu0 0
  %835 = vmatprep.subr.bf16.mxu0 0
  %836 = vmatpush1.bf16.msra.mxu0 0
  %837 = vmatprep.subr.bf16.mxu0 0
  %838 = vmatpush1.bf16.msra.mxu0 0
  %839 = vmatprep.subr.bf16.mxu0 0
  %840 = vmatpush1.bf16.msra.mxu0 0
  %841 = vmatprep.subr.bf16.mxu0 0
  %842 = vmatpush1.bf16.msra.mxu0 0
  %843 = vmatprep.subr.bf16.mxu0 %v786
  %844 = vmatpush1.bf16.msra.mxu0 %v783
  %845 = vmatprep.subr.bf16.mxu0 0
  %846 = vmatpush2.bf16.msra.mxu0 0
  %847 = vmatprep.subr.bf16.mxu0 0
  %848 = vmatpush2.bf16.msra.mxu0 0
  %849 = vmatprep.subr.bf16.mxu0 0
  %850 = vmatpush2.bf16.msra.mxu0 0
  %851 = vmatprep.subr.bf16.mxu0 0
  %852 = vmatpush2.bf16.msra.mxu0 0
  %853 = vmatprep.subr.bf16.mxu0 0
  %854 = vmatpush2.bf16.msra.mxu0 0
  %855 = vmatprep.subr.bf16.mxu0 0
  %856 = vmatpush2.bf16.msra.mxu0 0
  %857 = vmatprep.subr.bf16.mxu0 0
  %858 = vmatpush2.bf16.msra.mxu0 0
  %859 = vmatprep.subr.bf16.mxu0 0
  %860 = vmatpush2.bf16.msra.mxu0 0
  %861 = vmatprep.mubr.bf16.mxu0 0
  %862 = vmatmul.mubr.bf16.gmra.mxu0 %v774
  %v863 = vpop.f32.mrf.mxu0
  %v864 = vadd.f32 0.0, %v863
  %v865 = vpop.f32.mrf.mxu0
  %v866 = vadd.f32 0.0, %v865
  %v867 = vpop.f32.mrf.mxu0
  %v868 = vpop.f32.mrf.mxu0
  %869 = vdwg.mxu0
  %v870 = vadd.f32 %v723, %v823
  %v871 = vadd.f32 %v724, %v825
  %v872 = vadd.f32 %v725, %v864
  %v873 = vadd.f32 %v726, %v866
  %874 = vrot.lane.b32.xlu0 %v30, 113
  %v875 = vpop.permute.xlu0 %874
  %876 = vrot.lane.b32.xlu0 %v34, 113
  %v877 = vpop.permute.xlu0 %876
  %878 = vrot.lane.b32.xlu0 %v31, 113
  %v879 = vpop.permute.xlu0 %878
  %880 = vrot.lane.b32.xlu0 %v35, 113
  %v881 = vpop.permute.xlu0 %880
  %vm882 = vcmp.lt.s32.totalorder %v47, 113
  %v883 = vsel %vm882, %v879, %v881
  %v884 = vsel %vm882, %v877, %v879
  %v885 = vsel %vm882, %v875, %v877
  %v886 = vsel %vm882, %v881, %v875
  %s887 = scalar_lea.vmem %s7, 24
  %v888 = vld [vmem:[%s887] sm:$0xf]
  %v890 = vlaneseq
  %v891 = vshrl.u32 %v890, 7
  %v892 = vsub.s32 0, %v891
  %v893 = vrot.slane %v888, %v892
  %v894 = vlaneseq
  %v895 = vshrl.u32 %v894, 7
  %v896 = vsub.s32 1, %v895
  %v897 = vrot.slane %v888, %v896
  %v898 = vlaneseq
  %v899 = vshrl.u32 %v898, 7
  %v900 = vsub.s32 2, %v899
  %v901 = vrot.slane %v888, %v900
  %v902 = vlaneseq
  %v903 = vshrl.u32 %v902, 7
  %v904 = vsub.s32 3, %v903
  %v905 = vrot.slane %v888, %v904
  %v910 = vmul.f32 %v885, %v893
  %v911 = vmul.f32 %v884, %v897
  %v912 = vmul.f32 %v883, %v901
  %v913 = vmul.f32 %v886, %v905
  %s914 = scalar_lea.vmem %s1, 24
  %v915 = vld [vmem:[%s914] sm:$0xf]
  %v916 = vpack.c.bf16 %v910, %v910
  %v917 = vpack.c.bf16 %v911, %v911
  %v918 = vpack.c.bf16 %v912, %v912
  %v919 = vpack.c.bf16 %v913, %v913
  %v921 = vsel %vm130, %v915, 0
  %v924 = vsel %vm134, %v916, 0
  %v927 = vsel %vm134, %v917, 0
  %v930 = vsel %vm134, %v918, 0
  %v933 = vsel %vm134, %v919, 0
  %935 = vmatprep.subr.bf16.mxu0 0
  %936 = vmatpush1.bf16.msra.mxu0 0
  %937 = vmatprep.subr.bf16.mxu0 0
  %938 = vmatpush1.bf16.msra.mxu0 0
  %939 = vmatprep.subr.bf16.mxu0 0
  %940 = vmatpush1.bf16.msra.mxu0 0
  %941 = vmatprep.subr.bf16.mxu0 0
  %942 = vmatpush1.bf16.msra.mxu0 0
  %943 = vmatprep.subr.bf16.mxu0 0
  %944 = vmatpush1.bf16.msra.mxu0 0
  %945 = vmatprep.subr.bf16.mxu0 0
  %946 = vmatpush1.bf16.msra.mxu0 0
  %947 = vmatprep.subr.bf16.mxu0 0
  %948 = vmatpush1.bf16.msra.mxu0 0
  %949 = vmatprep.subr.bf16.mxu0 %v927
  %950 = vmatpush1.bf16.msra.mxu0 %v924
  %951 = vmatprep.subr.bf16.mxu0 0
  %952 = vmatpush2.bf16.msra.mxu0 0
  %953 = vmatprep.subr.bf16.mxu0 0
  %954 = vmatpush2.bf16.msra.mxu0 0
  %955 = vmatprep.subr.bf16.mxu0 0
  %956 = vmatpush2.bf16.msra.mxu0 0
  %957 = vmatprep.subr.bf16.mxu0 0
  %958 = vmatpush2.bf16.msra.mxu0 0
  %959 = vmatprep.subr.bf16.mxu0 0
  %960 = vmatpush2.bf16.msra.mxu0 0
  %961 = vmatprep.subr.bf16.mxu0 0
  %962 = vmatpush2.bf16.msra.mxu0 0
  %963 = vmatprep.subr.bf16.mxu0 0
  %964 = vmatpush2.bf16.msra.mxu0 0
  %965 = vmatprep.subr.bf16.mxu0 0
  %966 = vmatpush2.bf16.msra.mxu0 0
  %967 = vmatprep.mubr.bf16.mxu0 0
  %968 = vmatmul.mubr.bf16.gmra.mxu0 %v921
  %v969 = vpop.f32.mrf.mxu0
  %v970 = vadd.f32 0.0, %v969
  %v971 = vpop.f32.mrf.mxu0
  %v972 = vadd.f32 0.0, %v971
  %v973 = vpop.f32.mrf.mxu0
  %v974 = vpop.f32.mrf.mxu0
  %975 = vdwg.mxu0
  %976 = vmatprep.subr.bf16.mxu0 0
  %977 = vmatpush1.bf16.msra.mxu0 0
  %978 = vmatprep.subr.bf16.mxu0 0
  %979 = vmatpush1.bf16.msra.mxu0 0
  %980 = vmatprep.subr.bf16.mxu0 0
  %981 = vmatpush1.bf16.msra.mxu0 0
  %982 = vmatprep.subr.bf16.mxu0 0
  %983 = vmatpush1.bf16.msra.mxu0 0
  %984 = vmatprep.subr.bf16.mxu0 0
  %985 = vmatpush1.bf16.msra.mxu0 0
  %986 = vmatprep.subr.bf16.mxu0 0
  %987 = vmatpush1.bf16.msra.mxu0 0
  %988 = vmatprep.subr.bf16.mxu0 0
  %989 = vmatpush1.bf16.msra.mxu0 0
  %990 = vmatprep.subr.bf16.mxu0 %v933
  %991 = vmatpush1.bf16.msra.mxu0 %v930
  %992 = vmatprep.subr.bf16.mxu0 0
  %993 = vmatpush2.bf16.msra.mxu0 0
  %994 = vmatprep.subr.bf16.mxu0 0
  %995 = vmatpush2.bf16.msra.mxu0 0
  %996 = vmatprep.subr.bf16.mxu0 0
  %997 = vmatpush2.bf16.msra.mxu0 0
  %998 = vmatprep.subr.bf16.mxu0 0
  %999 = vmatpush2.bf16.msra.mxu0 0
  %1000 = vmatprep.subr.bf16.mxu0 0
  %1001 = vmatpush2.bf16.msra.mxu0 0
  %1002 = vmatprep.subr.bf16.mxu0 0
  %1003 = vmatpush2.bf16.msra.mxu0 0
  %1004 = vmatprep.subr.bf16.mxu0 0
  %1005 = vmatpush2.bf16.msra.mxu0 0
  %1006 = vmatprep.subr.bf16.mxu0 0
  %1007 = vmatpush2.bf16.msra.mxu0 0
  %1008 = vmatprep.mubr.bf16.mxu0 0
  %1009 = vmatmul.mubr.bf16.gmra.mxu0 %v921
  %v1010 = vpop.f32.mrf.mxu0
  %v1011 = vadd.f32 0.0, %v1010
  %v1012 = vpop.f32.mrf.mxu0
  %v1013 = vadd.f32 0.0, %v1012
  %v1014 = vpop.f32.mrf.mxu0
  %v1015 = vpop.f32.mrf.mxu0
  %1016 = vdwg.mxu0
  %v1017 = vadd.f32 %v870, %v970
  %v1018 = vadd.f32 %v871, %v972
  %v1019 = vadd.f32 %v872, %v1011
  %v1020 = vadd.f32 %v873, %v1013
  %1021 = vrot.lane.b32.xlu0 %v30, 112
  %v1022 = vpop.permute.xlu0 %1021
  %1023 = vrot.lane.b32.xlu0 %v34, 112
  %v1024 = vpop.permute.xlu0 %1023
  %1025 = vrot.lane.b32.xlu0 %v31, 112
  %v1026 = vpop.permute.xlu0 %1025
  %1027 = vrot.lane.b32.xlu0 %v35, 112
  %v1028 = vpop.permute.xlu0 %1027
  %vm1029 = vcmp.lt.s32.totalorder %v47, 112
  %v1030 = vsel %vm1029, %v1026, %v1028
  %v1031 = vsel %vm1029, %v1024, %v1026
  %v1032 = vsel %vm1029, %v1022, %v1024
  %v1033 = vsel %vm1029, %v1028, %v1022
  %s1034 = scalar_lea.vmem %s7, 28
  %v1035 = vld [vmem:[%s1034] sm:$0xf]
  %v1037 = vlaneseq
  %v1038 = vshrl.u32 %v1037, 7
  %v1039 = vsub.s32 0, %v1038
  %v1040 = vrot.slane %v1035, %v1039
  %v1041 = vlaneseq
  %v1042 = vshrl.u32 %v1041, 7
  %v1043 = vsub.s32 1, %v1042
  %v1044 = vrot.slane %v1035, %v1043
  %v1045 = vlaneseq
  %v1046 = vshrl.u32 %v1045, 7
  %v1047 = vsub.s32 2, %v1046
  %v1048 = vrot.slane %v1035, %v1047
  %v1049 = vlaneseq
  %v1050 = vshrl.u32 %v1049, 7
  %v1051 = vsub.s32 3, %v1050
  %v1052 = vrot.slane %v1035, %v1051
  %v1057 = vmul.f32 %v1032, %v1040
  %v1058 = vmul.f32 %v1031, %v1044
  %v1059 = vmul.f32 %v1030, %v1048
  %v1060 = vmul.f32 %v1033, %v1052
  %s1061 = scalar_lea.vmem %s1, 28
  %v1062 = vld [vmem:[%s1061] sm:$0xf]
  %v1063 = vpack.c.bf16 %v1057, %v1057
  %v1064 = vpack.c.bf16 %v1058, %v1058
  %v1065 = vpack.c.bf16 %v1059, %v1059
  %v1066 = vpack.c.bf16 %v1060, %v1060
  %v1068 = vsel %vm130, %v1062, 0
  %v1071 = vsel %vm134, %v1063, 0
  %v1074 = vsel %vm134, %v1064, 0
  %v1077 = vsel %vm134, %v1065, 0
  %v1080 = vsel %vm134, %v1066, 0
  %1082 = vmatprep.subr.bf16.mxu0 0
  %1083 = vmatpush1.bf16.msra.mxu0 0
  %1084 = vmatprep.subr.bf16.mxu0 0
  %1085 = vmatpush1.bf16.msra.mxu0 0
  %1086 = vmatprep.subr.bf16.mxu0 0
  %1087 = vmatpush1.bf16.msra.mxu0 0
  %1088 = vmatprep.subr.bf16.mxu0 0
  %1089 = vmatpush1.bf16.msra.mxu0 0
  %1090 = vmatprep.subr.bf16.mxu0 0
  %1091 = vmatpush1.bf16.msra.mxu0 0
  %1092 = vmatprep.subr.bf16.mxu0 0
  %1093 = vmatpush1.bf16.msra.mxu0 0
  %1094 = vmatprep.subr.bf16.mxu0 0
  %1095 = vmatpush1.bf16.msra.mxu0 0
  %1096 = vmatprep.subr.bf16.mxu0 %v1074
  %1097 = vmatpush1.bf16.msra.mxu0 %v1071
  %1098 = vmatprep.subr.bf16.mxu0 0
  %1099 = vmatpush2.bf16.msra.mxu0 0
  %1100 = vmatprep.subr.bf16.mxu0 0
  %1101 = vmatpush2.bf16.msra.mxu0 0
  %1102 = vmatprep.subr.bf16.mxu0 0
  %1103 = vmatpush2.bf16.msra.mxu0 0
  %1104 = vmatprep.subr.bf16.mxu0 0
  %1105 = vmatpush2.bf16.msra.mxu0 0
  %1106 = vmatprep.subr.bf16.mxu0 0
  %1107 = vmatpush2.bf16.msra.mxu0 0
  %1108 = vmatprep.subr.bf16.mxu0 0
  %1109 = vmatpush2.bf16.msra.mxu0 0
  %1110 = vmatprep.subr.bf16.mxu0 0
  %1111 = vmatpush2.bf16.msra.mxu0 0
  %1112 = vmatprep.subr.bf16.mxu0 0
  %1113 = vmatpush2.bf16.msra.mxu0 0
  %1114 = vmatprep.mubr.bf16.mxu0 0
  %1115 = vmatmul.mubr.bf16.gmra.mxu0 %v1068
  %v1116 = vpop.f32.mrf.mxu0
  %v1117 = vadd.f32 0.0, %v1116
  %v1118 = vpop.f32.mrf.mxu0
  %v1119 = vadd.f32 0.0, %v1118
  %v1120 = vpop.f32.mrf.mxu0
  %v1121 = vpop.f32.mrf.mxu0
  %1122 = vdwg.mxu0
  %1123 = vmatprep.subr.bf16.mxu0 0
  %1124 = vmatpush1.bf16.msra.mxu0 0
  %1125 = vmatprep.subr.bf16.mxu0 0
  %1126 = vmatpush1.bf16.msra.mxu0 0
  %1127 = vmatprep.subr.bf16.mxu0 0
  %1128 = vmatpush1.bf16.msra.mxu0 0
  %1129 = vmatprep.subr.bf16.mxu0 0
  %1130 = vmatpush1.bf16.msra.mxu0 0
  %1131 = vmatprep.subr.bf16.mxu0 0
  %1132 = vmatpush1.bf16.msra.mxu0 0
  %1133 = vmatprep.subr.bf16.mxu0 0
  %1134 = vmatpush1.bf16.msra.mxu0 0
  %1135 = vmatprep.subr.bf16.mxu0 0
  %1136 = vmatpush1.bf16.msra.mxu0 0
  %1137 = vmatprep.subr.bf16.mxu0 %v1080
  %1138 = vmatpush1.bf16.msra.mxu0 %v1077
  %1139 = vmatprep.subr.bf16.mxu0 0
  %1140 = vmatpush2.bf16.msra.mxu0 0
  %1141 = vmatprep.subr.bf16.mxu0 0
  %1142 = vmatpush2.bf16.msra.mxu0 0
  %1143 = vmatprep.subr.bf16.mxu0 0
  %1144 = vmatpush2.bf16.msra.mxu0 0
  %1145 = vmatprep.subr.bf16.mxu0 0
  %1146 = vmatpush2.bf16.msra.mxu0 0
  %1147 = vmatprep.subr.bf16.mxu0 0
  %1148 = vmatpush2.bf16.msra.mxu0 0
  %1149 = vmatprep.subr.bf16.mxu0 0
  %1150 = vmatpush2.bf16.msra.mxu0 0
  %1151 = vmatprep.subr.bf16.mxu0 0
  %1152 = vmatpush2.bf16.msra.mxu0 0
  %1153 = vmatprep.subr.bf16.mxu0 0
  %1154 = vmatpush2.bf16.msra.mxu0 0
  %1155 = vmatprep.mubr.bf16.mxu0 0
  %1156 = vmatmul.mubr.bf16.gmra.mxu0 %v1068
  %v1157 = vpop.f32.mrf.mxu0
  %v1158 = vadd.f32 0.0, %v1157
  %v1159 = vpop.f32.mrf.mxu0
  %v1160 = vadd.f32 0.0, %v1159
  %v1161 = vpop.f32.mrf.mxu0
  %v1162 = vpop.f32.mrf.mxu0
  %1163 = vdwg.mxu0
  %v1164 = vadd.f32 %v1017, %v1117
  %v1165 = vadd.f32 %v1018, %v1119
  %v1166 = vadd.f32 %v1019, %v1158
  %v1167 = vadd.f32 %v1020, %v1160
  %1168 = vrot.lane.b32.xlu0 %v30, 111
  %v1169 = vpop.permute.xlu0 %1168
  %1170 = vrot.lane.b32.xlu0 %v34, 111
  %v1171 = vpop.permute.xlu0 %1170
  %1172 = vrot.lane.b32.xlu0 %v31, 111
  %v1173 = vpop.permute.xlu0 %1172
  %1174 = vrot.lane.b32.xlu0 %v35, 111
  %v1175 = vpop.permute.xlu0 %1174
  %vm1176 = vcmp.lt.s32.totalorder %v47, 111
  %v1177 = vsel %vm1176, %v1173, %v1175
  %v1178 = vsel %vm1176, %v1171, %v1173
  %v1179 = vsel %vm1176, %v1169, %v1171
  %v1180 = vsel %vm1176, %v1175, %v1169
  %s1181 = scalar_lea.vmem %s7, 32
  %v1182 = vld [vmem:[%s1181] sm:$0xf]
  %v1184 = vlaneseq
  %v1185 = vshrl.u32 %v1184, 7
  %v1186 = vsub.s32 0, %v1185
  %v1187 = vrot.slane %v1182, %v1186
  %v1188 = vlaneseq
  %v1189 = vshrl.u32 %v1188, 7
  %v1190 = vsub.s32 1, %v1189
  %v1191 = vrot.slane %v1182, %v1190
  %v1192 = vlaneseq
  %v1193 = vshrl.u32 %v1192, 7
  %v1194 = vsub.s32 2, %v1193
  %v1195 = vrot.slane %v1182, %v1194
  %v1196 = vlaneseq
  %v1197 = vshrl.u32 %v1196, 7
  %v1198 = vsub.s32 3, %v1197
  %v1199 = vrot.slane %v1182, %v1198
  %v1204 = vmul.f32 %v1179, %v1187
  %v1205 = vmul.f32 %v1178, %v1191
  %v1206 = vmul.f32 %v1177, %v1195
  %v1207 = vmul.f32 %v1180, %v1199
  %s1208 = scalar_lea.vmem %s1, 32
  %v1209 = vld [vmem:[%s1208] sm:$0xf]
  %v1210 = vpack.c.bf16 %v1204, %v1204
  %v1211 = vpack.c.bf16 %v1205, %v1205
  %v1212 = vpack.c.bf16 %v1206, %v1206
  %v1213 = vpack.c.bf16 %v1207, %v1207
  %v1215 = vsel %vm130, %v1209, 0
  %v1218 = vsel %vm134, %v1210, 0
  %v1221 = vsel %vm134, %v1211, 0
  %v1224 = vsel %vm134, %v1212, 0
  %v1227 = vsel %vm134, %v1213, 0
  %1229 = vmatprep.subr.bf16.mxu0 0
  %1230 = vmatpush1.bf16.msra.mxu0 0
  %1231 = vmatprep.subr.bf16.mxu0 0
  %1232 = vmatpush1.bf16.msra.mxu0 0
  %1233 = vmatprep.subr.bf16.mxu0 0
  %1234 = vmatpush1.bf16.msra.mxu0 0
  %1235 = vmatprep.subr.bf16.mxu0 0
  %1236 = vmatpush1.bf16.msra.mxu0 0
  %1237 = vmatprep.subr.bf16.mxu0 0
  %1238 = vmatpush1.bf16.msra.mxu0 0
  %1239 = vmatprep.subr.bf16.mxu0 0
  %1240 = vmatpush1.bf16.msra.mxu0 0
  %1241 = vmatprep.subr.bf16.mxu0 0
  %1242 = vmatpush1.bf16.msra.mxu0 0
  %1243 = vmatprep.subr.bf16.mxu0 %v1221
  %1244 = vmatpush1.bf16.msra.mxu0 %v1218
  %1245 = vmatprep.subr.bf16.mxu0 0
  %1246 = vmatpush2.bf16.msra.mxu0 0
  %1247 = vmatprep.subr.bf16.mxu0 0
  %1248 = vmatpush2.bf16.msra.mxu0 0
  %1249 = vmatprep.subr.bf16.mxu0 0
  %1250 = vmatpush2.bf16.msra.mxu0 0
  %1251 = vmatprep.subr.bf16.mxu0 0
  %1252 = vmatpush2.bf16.msra.mxu0 0
  %1253 = vmatprep.subr.bf16.mxu0 0
  %1254 = vmatpush2.bf16.msra.mxu0 0
  %1255 = vmatprep.subr.bf16.mxu0 0
  %1256 = vmatpush2.bf16.msra.mxu0 0
  %1257 = vmatprep.subr.bf16.mxu0 0
  %1258 = vmatpush2.bf16.msra.mxu0 0
  %1259 = vmatprep.subr.bf16.mxu0 0
  %1260 = vmatpush2.bf16.msra.mxu0 0
  %1261 = vmatprep.mubr.bf16.mxu0 0
  %1262 = vmatmul.mubr.bf16.gmra.mxu0 %v1215
  %v1263 = vpop.f32.mrf.mxu0
  %v1264 = vadd.f32 0.0, %v1263
  %v1265 = vpop.f32.mrf.mxu0
  %v1266 = vadd.f32 0.0, %v1265
  %v1267 = vpop.f32.mrf.mxu0
  %v1268 = vpop.f32.mrf.mxu0
  %1269 = vdwg.mxu0
  %1270 = vmatprep.subr.bf16.mxu0 0
  %1271 = vmatpush1.bf16.msra.mxu0 0
  %1272 = vmatprep.subr.bf16.mxu0 0
  %1273 = vmatpush1.bf16.msra.mxu0 0
  %1274 = vmatprep.subr.bf16.mxu0 0
  %1275 = vmatpush1.bf16.msra.mxu0 0
  %1276 = vmatprep.subr.bf16.mxu0 0
  %1277 = vmatpush1.bf16.msra.mxu0 0
  %1278 = vmatprep.subr.bf16.mxu0 0
  %1279 = vmatpush1.bf16.msra.mxu0 0
  %1280 = vmatprep.subr.bf16.mxu0 0
  %1281 = vmatpush1.bf16.msra.mxu0 0
  %1282 = vmatprep.subr.bf16.mxu0 0
  %1283 = vmatpush1.bf16.msra.mxu0 0
  %1284 = vmatprep.subr.bf16.mxu0 %v1227
  %1285 = vmatpush1.bf16.msra.mxu0 %v1224
  %1286 = vmatprep.subr.bf16.mxu0 0
  %1287 = vmatpush2.bf16.msra.mxu0 0
  %1288 = vmatprep.subr.bf16.mxu0 0
  %1289 = vmatpush2.bf16.msra.mxu0 0
  %1290 = vmatprep.subr.bf16.mxu0 0
  %1291 = vmatpush2.bf16.msra.mxu0 0
  %1292 = vmatprep.subr.bf16.mxu0 0
  %1293 = vmatpush2.bf16.msra.mxu0 0
  %1294 = vmatprep.subr.bf16.mxu0 0
  %1295 = vmatpush2.bf16.msra.mxu0 0
  %1296 = vmatprep.subr.bf16.mxu0 0
  %1297 = vmatpush2.bf16.msra.mxu0 0
  %1298 = vmatprep.subr.bf16.mxu0 0
  %1299 = vmatpush2.bf16.msra.mxu0 0
  %1300 = vmatprep.subr.bf16.mxu0 0
  %1301 = vmatpush2.bf16.msra.mxu0 0
  %1302 = vmatprep.mubr.bf16.mxu0 0
  %1303 = vmatmul.mubr.bf16.gmra.mxu0 %v1215
  %v1304 = vpop.f32.mrf.mxu0
  %v1305 = vadd.f32 0.0, %v1304
  %v1306 = vpop.f32.mrf.mxu0
  %v1307 = vadd.f32 0.0, %v1306
  %v1308 = vpop.f32.mrf.mxu0
  %v1309 = vpop.f32.mrf.mxu0
  %1310 = vdwg.mxu0
  %v1311 = vadd.f32 %v1164, %v1264
  %v1312 = vadd.f32 %v1165, %v1266
  %v1313 = vadd.f32 %v1166, %v1305
  %v1314 = vadd.f32 %v1167, %v1307
  %v1315 = vadd.f32 %v1311, %v1312
  %v1316 = vadd.f32 %v1315, %v1313
  %v1317 = vadd.f32 %v1316, %v1314
  %1318 = vadd.xlane.f32.xlu0 %v1317
  %v1319 = vpop.xlane.xlu0 %1318
  %v1320 = vmul.f32 %v1319, 0.001953125
  %v1321 = vsub.f32 %v1311, %v1320
  %v1322 = vsub.f32 %v1312, %v1320
  %v1323 = vsub.f32 %v1313, %v1320
  %v1324 = vsub.f32 %v1314, %v1320
  %v1325 = vmul.f32 %v1321, %v1321
  %v1326 = vmul.f32 %v1322, %v1322
  %v1327 = vmul.f32 %v1323, %v1323
  %v1328 = vmul.f32 %v1324, %v1324
  %v1329 = vadd.f32 %v1325, %v1326
  %v1330 = vadd.f32 %v1329, %v1327
  %v1331 = vadd.f32 %v1330, %v1328
  %1332 = vadd.xlane.f32.xlu0 %v1331
  %v1333 = vpop.xlane.xlu0 %1332
  %v1334 = vmul.f32 %v1333, 0.001953125
  %v1335 = vadd.f32 %v1334, 1e-05
  %v1336 = vrsqrt.pop %v1335
  %v1337 = vmul.f32 %v1321, %v1336
  %v1338 = vmul.f32 %v1322, %v1336
  %v1339 = vmul.f32 %v1323, %v1336
  %v1340 = vmul.f32 %v1324, %v1336
  %v1341 = vld [vmem:[%s2] sm:$0xff]
  %1343 = vset.pattern.permute.xlu0 0
  %1344 = vperm.xlu0 %1343, %v1341
  %v1345 = vpop.permute.xlu0 %1344
  %v1347 = vmul.f32 %v1337, %v1345
  %v1348 = vmul.f32 %v1338, %v1345
  %v1349 = vmul.f32 %v1339, %v1345
  %v1350 = vmul.f32 %v1340, %v1345
  %v1351 = vld [vmem:[%s3] sm:$0xff]
  %1353 = vset.pattern.permute.xlu0 0
  %1354 = vperm.xlu0 %1353, %v1351
  %v1355 = vpop.permute.xlu0 %1354
  %v1357 = vadd.f32 %v1347, %v1355
  %v1358 = vadd.f32 %v1348, %v1355
  %v1359 = vadd.f32 %v1349, %v1355
  %v1360 = vadd.f32 %v1350, %v1355
  %v1361 = vmax.f32 %v1357, 0.0
  %v1362 = vmax.f32 %v1358, 0.0
  %v1363 = vmax.f32 %v1359, 0.0
  %v1364 = vmax.f32 %v1360, 0.0
  %1365 = vrot.lane.b32.xlu0 %v1361, 17
  %v1366 = vpop.permute.xlu0 %1365
  %1367 = vrot.lane.b32.xlu0 %v1362, 17
  %v1368 = vpop.permute.xlu0 %1367
  %1369 = vrot.lane.b32.xlu0 %v1363, 17
  %v1370 = vpop.permute.xlu0 %1369
  %1371 = vrot.lane.b32.xlu0 %v1364, 17
  %v1372 = vpop.permute.xlu0 %1371
  %v1373 = vsel %vm48, %v1370, %v1372
  %v1374 = vsel %vm48, %v1368, %v1370
  %v1375 = vsel %vm48, %v1366, %v1368
  %v1376 = vsel %vm48, %v1372, %v1366
  %v1377 = vmul.f32 %v1376, %v58
  %v1378 = vmul.f32 %v1375, %v62
  %v1379 = vmul.f32 %v1374, %v66
  %v1380 = vmul.f32 %v1373, %v70
  %v1381 = vld [vmem:[%s4] sm:$0xf]
  %v1382 = vpack.c.bf16 %v1377, %v1377
  %v1383 = vpack.c.bf16 %v1378, %v1378
  %v1384 = vpack.c.bf16 %v1379, %v1379
  %v1385 = vpack.c.bf16 %v1380, %v1380
  %1386 = vrot.lane.b32.xlu0 %v1361, 16
  %v1387 = vpop.permute.xlu0 %1386
  %1388 = vrot.lane.b32.xlu0 %v1362, 16
  %v1389 = vpop.permute.xlu0 %1388
  %1390 = vrot.lane.b32.xlu0 %v1363, 16
  %v1391 = vpop.permute.xlu0 %1390
  %1392 = vrot.lane.b32.xlu0 %v1364, 16
  %v1393 = vpop.permute.xlu0 %1392
  %v1394 = vsel %vm92, %v1391, %v1393
  %v1395 = vsel %vm92, %v1389, %v1391
  %v1396 = vsel %vm92, %v1387, %v1389
  %v1397 = vsel %vm92, %v1393, %v1387
  %v1398 = vmul.f32 %v1397, %v103
  %v1399 = vmul.f32 %v1396, %v107
  %v1400 = vmul.f32 %v1395, %v111
  %v1401 = vmul.f32 %v1394, %v115
  %s1402 = scalar_lea.vmem %s4, 4
  %v1403 = vld [vmem:[%s1402] sm:$0xf]
  %v1404 = vpack.c.bf16 %v1398, %v1398
  %v1405 = vpack.c.bf16 %v1399, %v1399
  %v1406 = vpack.c.bf16 %v1400, %v1400
  %v1407 = vpack.c.bf16 %v1401, %v1401
  %vm1408 = vcmask 64512
  %v1410 = vsel %vm1408, %v1403, 0
  %vm1412 = vcmask 1043456
  %v1414 = vsel %vm1412, %v1404, 0
  %v1417 = vsel %vm1412, %v1405, 0
  %v1420 = vsel %vm1412, %v1406, 0
  %v1423 = vsel %vm1412, %v1407, 0
  %1425 = vmatprep.subr.bf16.mxu0 0
  %1426 = vmatpush1.bf16.msra.mxu0 0
  %1427 = vmatprep.subr.bf16.mxu0 0
  %1428 = vmatpush1.bf16.msra.mxu0 0
  %1429 = vmatprep.subr.bf16.mxu0 0
  %1430 = vmatpush1.bf16.msra.mxu0 0
  %1431 = vmatprep.subr.bf16.mxu0 0
  %1432 = vmatpush1.bf16.msra.mxu0 0
  %1433 = vmatprep.subr.bf16.mxu0 0
  %1434 = vmatpush1.bf16.msra.mxu0 0
  %1435 = vmatprep.subr.bf16.mxu0 0
  %1436 = vmatpush1.bf16.msra.mxu0 0
  %1437 = vmatprep.subr.bf16.mxu0 0
  %1438 = vmatpush1.bf16.msra.mxu0 0
  %1439 = vmatprep.subr.bf16.mxu0 %v1417
  %1440 = vmatpush1.bf16.msra.mxu0 %v1414
  %1441 = vmatprep.subr.bf16.mxu0 0
  %1442 = vmatpush2.bf16.msra.mxu0 0
  %1443 = vmatprep.subr.bf16.mxu0 0
  %1444 = vmatpush2.bf16.msra.mxu0 0
  %1445 = vmatprep.subr.bf16.mxu0 0
  %1446 = vmatpush2.bf16.msra.mxu0 0
  %1447 = vmatprep.subr.bf16.mxu0 0
  %1448 = vmatpush2.bf16.msra.mxu0 0
  %1449 = vmatprep.subr.bf16.mxu0 0
  %1450 = vmatpush2.bf16.msra.mxu0 0
  %1451 = vmatprep.subr.bf16.mxu0 0
  %1452 = vmatpush2.bf16.msra.mxu0 0
  %1453 = vmatprep.subr.bf16.mxu0 0
  %1454 = vmatpush2.bf16.msra.mxu0 0
  %1455 = vmatprep.subr.bf16.mxu0 0
  %1456 = vmatpush2.bf16.msra.mxu0 0
  %1457 = vmatprep.mubr.bf16.mxu0 0
  %1458 = vmatmul.mubr.bf16.gmra.mxu0 %v1410
  %v1459 = vpop.f32.mrf.mxu0
  %v1460 = vadd.f32 0.0, %v1459
  %v1461 = vpop.f32.mrf.mxu0
  %v1462 = vadd.f32 0.0, %v1461
  %v1463 = vpop.f32.mrf.mxu0
  %v1464 = vpop.f32.mrf.mxu0
  %1465 = vdwg.mxu0
  %1466 = vmatprep.subr.bf16.mxu0 0
  %1467 = vmatpush1.bf16.msra.mxu0 0
  %1468 = vmatprep.subr.bf16.mxu0 0
  %1469 = vmatpush1.bf16.msra.mxu0 0
  %1470 = vmatprep.subr.bf16.mxu0 0
  %1471 = vmatpush1.bf16.msra.mxu0 0
  %1472 = vmatprep.subr.bf16.mxu0 0
  %1473 = vmatpush1.bf16.msra.mxu0 0
  %1474 = vmatprep.subr.bf16.mxu0 0
  %1475 = vmatpush1.bf16.msra.mxu0 0
  %1476 = vmatprep.subr.bf16.mxu0 0
  %1477 = vmatpush1.bf16.msra.mxu0 0
  %1478 = vmatprep.subr.bf16.mxu0 0
  %1479 = vmatpush1.bf16.msra.mxu0 0
  %1480 = vmatprep.subr.bf16.mxu0 %v1423
  %1481 = vmatpush1.bf16.msra.mxu0 %v1420
  %1482 = vmatprep.subr.bf16.mxu0 0
  %1483 = vmatpush2.bf16.msra.mxu0 0
  %1484 = vmatprep.subr.bf16.mxu0 0
  %1485 = vmatpush2.bf16.msra.mxu0 0
  %1486 = vmatprep.subr.bf16.mxu0 0
  %1487 = vmatpush2.bf16.msra.mxu0 0
  %1488 = vmatprep.subr.bf16.mxu0 0
  %1489 = vmatpush2.bf16.msra.mxu0 0
  %1490 = vmatprep.subr.bf16.mxu0 0
  %1491 = vmatpush2.bf16.msra.mxu0 0
  %1492 = vmatprep.subr.bf16.mxu0 0
  %1493 = vmatpush2.bf16.msra.mxu0 0
  %1494 = vmatprep.subr.bf16.mxu0 0
  %1495 = vmatpush2.bf16.msra.mxu0 0
  %1496 = vmatprep.subr.bf16.mxu0 0
  %1497 = vmatpush2.bf16.msra.mxu0 0
  %1498 = vmatprep.mubr.bf16.mxu0 0
  %1499 = vmatmul.mubr.bf16.gmra.mxu0 %v1410
  %v1500 = vpop.f32.mrf.mxu0
  %v1501 = vadd.f32 0.0, %v1500
  %v1502 = vpop.f32.mrf.mxu0
  %v1503 = vadd.f32 0.0, %v1502
  %v1504 = vpop.f32.mrf.mxu0
  %v1505 = vpop.f32.mrf.mxu0
  %1506 = vdwg.mxu0
  %v1508 = vsel %vm1408, %v1381, 0
  %v1511 = vsel %vm1412, %v1382, 0
  %v1514 = vsel %vm1412, %v1383, 0
  %v1517 = vsel %vm1412, %v1384, 0
  %v1520 = vsel %vm1412, %v1385, 0
  %1522 = vmatprep.subr.bf16.mxu0 0
  %1523 = vmatpush1.bf16.msra.mxu0 0
  %1524 = vmatprep.subr.bf16.mxu0 0
  %1525 = vmatpush1.bf16.msra.mxu0 0
  %1526 = vmatprep.subr.bf16.mxu0 0
  %1527 = vmatpush1.bf16.msra.mxu0 0
  %1528 = vmatprep.subr.bf16.mxu0 0
  %1529 = vmatpush1.bf16.msra.mxu0 0
  %1530 = vmatprep.subr.bf16.mxu0 0
  %1531 = vmatpush1.bf16.msra.mxu0 0
  %1532 = vmatprep.subr.bf16.mxu0 0
  %1533 = vmatpush1.bf16.msra.mxu0 0
  %1534 = vmatprep.subr.bf16.mxu0 0
  %1535 = vmatpush1.bf16.msra.mxu0 0
  %1536 = vmatprep.subr.bf16.mxu0 %v1514
  %1537 = vmatpush1.bf16.msra.mxu0 %v1511
  %1538 = vmatprep.subr.bf16.mxu0 0
  %1539 = vmatpush2.bf16.msra.mxu0 0
  %1540 = vmatprep.subr.bf16.mxu0 0
  %1541 = vmatpush2.bf16.msra.mxu0 0
  %1542 = vmatprep.subr.bf16.mxu0 0
  %1543 = vmatpush2.bf16.msra.mxu0 0
  %1544 = vmatprep.subr.bf16.mxu0 0
  %1545 = vmatpush2.bf16.msra.mxu0 0
  %1546 = vmatprep.subr.bf16.mxu0 0
  %1547 = vmatpush2.bf16.msra.mxu0 0
  %1548 = vmatprep.subr.bf16.mxu0 0
  %1549 = vmatpush2.bf16.msra.mxu0 0
  %1550 = vmatprep.subr.bf16.mxu0 0
  %1551 = vmatpush2.bf16.msra.mxu0 0
  %1552 = vmatprep.subr.bf16.mxu0 0
  %1553 = vmatpush2.bf16.msra.mxu0 0
  %1554 = vmatprep.mubr.bf16.mxu0 0
  %1555 = vmatmul.mubr.bf16.gmra.mxu0 %v1508
  %v1556 = vpop.f32.mrf.mxu0
  %v1557 = vadd.f32 %v1460, %v1556
  %v1558 = vpop.f32.mrf.mxu0
  %v1559 = vadd.f32 %v1462, %v1558
  %v1560 = vpop.f32.mrf.mxu0
  %v1561 = vpop.f32.mrf.mxu0
  %1562 = vdwg.mxu0
  %1563 = vmatprep.subr.bf16.mxu0 0
  %1564 = vmatpush1.bf16.msra.mxu0 0
  %1565 = vmatprep.subr.bf16.mxu0 0
  %1566 = vmatpush1.bf16.msra.mxu0 0
  %1567 = vmatprep.subr.bf16.mxu0 0
  %1568 = vmatpush1.bf16.msra.mxu0 0
  %1569 = vmatprep.subr.bf16.mxu0 0
  %1570 = vmatpush1.bf16.msra.mxu0 0
  %1571 = vmatprep.subr.bf16.mxu0 0
  %1572 = vmatpush1.bf16.msra.mxu0 0
  %1573 = vmatprep.subr.bf16.mxu0 0
  %1574 = vmatpush1.bf16.msra.mxu0 0
  %1575 = vmatprep.subr.bf16.mxu0 0
  %1576 = vmatpush1.bf16.msra.mxu0 0
  %1577 = vmatprep.subr.bf16.mxu0 %v1520
  %1578 = vmatpush1.bf16.msra.mxu0 %v1517
  %1579 = vmatprep.subr.bf16.mxu0 0
  %1580 = vmatpush2.bf16.msra.mxu0 0
  %1581 = vmatprep.subr.bf16.mxu0 0
  %1582 = vmatpush2.bf16.msra.mxu0 0
  %1583 = vmatprep.subr.bf16.mxu0 0
  %1584 = vmatpush2.bf16.msra.mxu0 0
  %1585 = vmatprep.subr.bf16.mxu0 0
  %1586 = vmatpush2.bf16.msra.mxu0 0
  %1587 = vmatprep.subr.bf16.mxu0 0
  %1588 = vmatpush2.bf16.msra.mxu0 0
  %1589 = vmatprep.subr.bf16.mxu0 0
  %1590 = vmatpush2.bf16.msra.mxu0 0
  %1591 = vmatprep.subr.bf16.mxu0 0
  %1592 = vmatpush2.bf16.msra.mxu0 0
  %1593 = vmatprep.subr.bf16.mxu0 0
  %1594 = vmatpush2.bf16.msra.mxu0 0
  %1595 = vmatprep.mubr.bf16.mxu0 0
  %1596 = vmatmul.mubr.bf16.gmra.mxu0 %v1508
  %v1597 = vpop.f32.mrf.mxu0
  %v1598 = vadd.f32 %v1501, %v1597
  %v1599 = vpop.f32.mrf.mxu0
  %v1600 = vadd.f32 %v1503, %v1599
  %v1601 = vpop.f32.mrf.mxu0
  %v1602 = vpop.f32.mrf.mxu0
  %1603 = vdwg.mxu0
  %1604 = vrot.lane.b32.xlu0 %v1361, 15
  %v1605 = vpop.permute.xlu0 %1604
  %1606 = vrot.lane.b32.xlu0 %v1362, 15
  %v1607 = vpop.permute.xlu0 %1606
  %1608 = vrot.lane.b32.xlu0 %v1363, 15
  %v1609 = vpop.permute.xlu0 %1608
  %1610 = vrot.lane.b32.xlu0 %v1364, 15
  %v1611 = vpop.permute.xlu0 %1610
  %v1612 = vsel %vm334, %v1609, %v1611
  %v1613 = vsel %vm334, %v1607, %v1609
  %v1614 = vsel %vm334, %v1605, %v1607
  %v1615 = vsel %vm334, %v1611, %v1605
  %v1616 = vmul.f32 %v1615, %v345
  %v1617 = vmul.f32 %v1614, %v349
  %v1618 = vmul.f32 %v1613, %v353
  %v1619 = vmul.f32 %v1612, %v357
  %s1620 = scalar_lea.vmem %s4, 8
  %v1621 = vld [vmem:[%s1620] sm:$0xf]
  %v1622 = vpack.c.bf16 %v1616, %v1616
  %v1623 = vpack.c.bf16 %v1617, %v1617
  %v1624 = vpack.c.bf16 %v1618, %v1618
  %v1625 = vpack.c.bf16 %v1619, %v1619
  %v1627 = vsel %vm1408, %v1621, 0
  %v1630 = vsel %vm1412, %v1622, 0
  %v1633 = vsel %vm1412, %v1623, 0
  %v1636 = vsel %vm1412, %v1624, 0
  %v1639 = vsel %vm1412, %v1625, 0
  %1641 = vmatprep.subr.bf16.mxu0 0
  %1642 = vmatpush1.bf16.msra.mxu0 0
  %1643 = vmatprep.subr.bf16.mxu0 0
  %1644 = vmatpush1.bf16.msra.mxu0 0
  %1645 = vmatprep.subr.bf16.mxu0 0
  %1646 = vmatpush1.bf16.msra.mxu0 0
  %1647 = vmatprep.subr.bf16.mxu0 0
  %1648 = vmatpush1.bf16.msra.mxu0 0
  %1649 = vmatprep.subr.bf16.mxu0 0
  %1650 = vmatpush1.bf16.msra.mxu0 0
  %1651 = vmatprep.subr.bf16.mxu0 0
  %1652 = vmatpush1.bf16.msra.mxu0 0
  %1653 = vmatprep.subr.bf16.mxu0 0
  %1654 = vmatpush1.bf16.msra.mxu0 0
  %1655 = vmatprep.subr.bf16.mxu0 %v1633
  %1656 = vmatpush1.bf16.msra.mxu0 %v1630
  %1657 = vmatprep.subr.bf16.mxu0 0
  %1658 = vmatpush2.bf16.msra.mxu0 0
  %1659 = vmatprep.subr.bf16.mxu0 0
  %1660 = vmatpush2.bf16.msra.mxu0 0
  %1661 = vmatprep.subr.bf16.mxu0 0
  %1662 = vmatpush2.bf16.msra.mxu0 0
  %1663 = vmatprep.subr.bf16.mxu0 0
  %1664 = vmatpush2.bf16.msra.mxu0 0
  %1665 = vmatprep.subr.bf16.mxu0 0
  %1666 = vmatpush2.bf16.msra.mxu0 0
  %1667 = vmatprep.subr.bf16.mxu0 0
  %1668 = vmatpush2.bf16.msra.mxu0 0
  %1669 = vmatprep.subr.bf16.mxu0 0
  %1670 = vmatpush2.bf16.msra.mxu0 0
  %1671 = vmatprep.subr.bf16.mxu0 0
  %1672 = vmatpush2.bf16.msra.mxu0 0
  %1673 = vmatprep.mubr.bf16.mxu0 0
  %1674 = vmatmul.mubr.bf16.gmra.mxu0 %v1627
  %v1675 = vpop.f32.mrf.mxu0
  %v1676 = vadd.f32 0.0, %v1675
  %v1677 = vpop.f32.mrf.mxu0
  %v1678 = vadd.f32 0.0, %v1677
  %v1679 = vpop.f32.mrf.mxu0
  %v1680 = vpop.f32.mrf.mxu0
  %1681 = vdwg.mxu0
  %1682 = vmatprep.subr.bf16.mxu0 0
  %1683 = vmatpush1.bf16.msra.mxu0 0
  %1684 = vmatprep.subr.bf16.mxu0 0
  %1685 = vmatpush1.bf16.msra.mxu0 0
  %1686 = vmatprep.subr.bf16.mxu0 0
  %1687 = vmatpush1.bf16.msra.mxu0 0
  %1688 = vmatprep.subr.bf16.mxu0 0
  %1689 = vmatpush1.bf16.msra.mxu0 0
  %1690 = vmatprep.subr.bf16.mxu0 0
  %1691 = vmatpush1.bf16.msra.mxu0 0
  %1692 = vmatprep.subr.bf16.mxu0 0
  %1693 = vmatpush1.bf16.msra.mxu0 0
  %1694 = vmatprep.subr.bf16.mxu0 0
  %1695 = vmatpush1.bf16.msra.mxu0 0
  %1696 = vmatprep.subr.bf16.mxu0 %v1639
  %1697 = vmatpush1.bf16.msra.mxu0 %v1636
  %1698 = vmatprep.subr.bf16.mxu0 0
  %1699 = vmatpush2.bf16.msra.mxu0 0
  %1700 = vmatprep.subr.bf16.mxu0 0
  %1701 = vmatpush2.bf16.msra.mxu0 0
  %1702 = vmatprep.subr.bf16.mxu0 0
  %1703 = vmatpush2.bf16.msra.mxu0 0
  %1704 = vmatprep.subr.bf16.mxu0 0
  %1705 = vmatpush2.bf16.msra.mxu0 0
  %1706 = vmatprep.subr.bf16.mxu0 0
  %1707 = vmatpush2.bf16.msra.mxu0 0
  %1708 = vmatprep.subr.bf16.mxu0 0
  %1709 = vmatpush2.bf16.msra.mxu0 0
  %1710 = vmatprep.subr.bf16.mxu0 0
  %1711 = vmatpush2.bf16.msra.mxu0 0
  %1712 = vmatprep.subr.bf16.mxu0 0
  %1713 = vmatpush2.bf16.msra.mxu0 0
  %1714 = vmatprep.mubr.bf16.mxu0 0
  %1715 = vmatmul.mubr.bf16.gmra.mxu0 %v1627
  %v1716 = vpop.f32.mrf.mxu0
  %v1717 = vadd.f32 0.0, %v1716
  %v1718 = vpop.f32.mrf.mxu0
  %v1719 = vadd.f32 0.0, %v1718
  %v1720 = vpop.f32.mrf.mxu0
  %v1721 = vpop.f32.mrf.mxu0
  %1722 = vdwg.mxu0
  %v1723 = vadd.f32 %v1557, %v1676
  %v1724 = vadd.f32 %v1559, %v1678
  %v1725 = vadd.f32 %v1598, %v1717
  %v1726 = vadd.f32 %v1600, %v1719
  %1727 = vrot.lane.b32.xlu0 %v1361, 1
  %v1728 = vpop.permute.xlu0 %1727
  %1729 = vrot.lane.b32.xlu0 %v1362, 1
  %v1730 = vpop.permute.xlu0 %1729
  %1731 = vrot.lane.b32.xlu0 %v1363, 1
  %v1732 = vpop.permute.xlu0 %1731
  %1733 = vrot.lane.b32.xlu0 %v1364, 1
  %v1734 = vpop.permute.xlu0 %1733
  %v1735 = vsel %vm481, %v1732, %v1734
  %v1736 = vsel %vm481, %v1730, %v1732
  %v1737 = vsel %vm481, %v1728, %v1730
  %v1738 = vsel %vm481, %v1734, %v1728
  %v1739 = vmul.f32 %v1738, %v492
  %v1740 = vmul.f32 %v1737, %v496
  %v1741 = vmul.f32 %v1736, %v500
  %v1742 = vmul.f32 %v1735, %v504
  %s1743 = scalar_lea.vmem %s4, 12
  %v1744 = vld [vmem:[%s1743] sm:$0xf]
  %v1745 = vpack.c.bf16 %v1739, %v1739
  %v1746 = vpack.c.bf16 %v1740, %v1740
  %v1747 = vpack.c.bf16 %v1741, %v1741
  %v1748 = vpack.c.bf16 %v1742, %v1742
  %v1750 = vsel %vm1408, %v1744, 0
  %v1753 = vsel %vm1412, %v1745, 0
  %v1756 = vsel %vm1412, %v1746, 0
  %v1759 = vsel %vm1412, %v1747, 0
  %v1762 = vsel %vm1412, %v1748, 0
  %1764 = vmatprep.subr.bf16.mxu0 0
  %1765 = vmatpush1.bf16.msra.mxu0 0
  %1766 = vmatprep.subr.bf16.mxu0 0
  %1767 = vmatpush1.bf16.msra.mxu0 0
  %1768 = vmatprep.subr.bf16.mxu0 0
  %1769 = vmatpush1.bf16.msra.mxu0 0
  %1770 = vmatprep.subr.bf16.mxu0 0
  %1771 = vmatpush1.bf16.msra.mxu0 0
  %1772 = vmatprep.subr.bf16.mxu0 0
  %1773 = vmatpush1.bf16.msra.mxu0 0
  %1774 = vmatprep.subr.bf16.mxu0 0
  %1775 = vmatpush1.bf16.msra.mxu0 0
  %1776 = vmatprep.subr.bf16.mxu0 0
  %1777 = vmatpush1.bf16.msra.mxu0 0
  %1778 = vmatprep.subr.bf16.mxu0 %v1756
  %1779 = vmatpush1.bf16.msra.mxu0 %v1753
  %1780 = vmatprep.subr.bf16.mxu0 0
  %1781 = vmatpush2.bf16.msra.mxu0 0
  %1782 = vmatprep.subr.bf16.mxu0 0
  %1783 = vmatpush2.bf16.msra.mxu0 0
  %1784 = vmatprep.subr.bf16.mxu0 0
  %1785 = vmatpush2.bf16.msra.mxu0 0
  %1786 = vmatprep.subr.bf16.mxu0 0
  %1787 = vmatpush2.bf16.msra.mxu0 0
  %1788 = vmatprep.subr.bf16.mxu0 0
  %1789 = vmatpush2.bf16.msra.mxu0 0
  %1790 = vmatprep.subr.bf16.mxu0 0
  %1791 = vmatpush2.bf16.msra.mxu0 0
  %1792 = vmatprep.subr.bf16.mxu0 0
  %1793 = vmatpush2.bf16.msra.mxu0 0
  %1794 = vmatprep.subr.bf16.mxu0 0
  %1795 = vmatpush2.bf16.msra.mxu0 0
  %1796 = vmatprep.mubr.bf16.mxu0 0
  %1797 = vmatmul.mubr.bf16.gmra.mxu0 %v1750
  %v1798 = vpop.f32.mrf.mxu0
  %v1799 = vadd.f32 0.0, %v1798
  %v1800 = vpop.f32.mrf.mxu0
  %v1801 = vadd.f32 0.0, %v1800
  %v1802 = vpop.f32.mrf.mxu0
  %v1803 = vpop.f32.mrf.mxu0
  %1804 = vdwg.mxu0
  %1805 = vmatprep.subr.bf16.mxu0 0
  %1806 = vmatpush1.bf16.msra.mxu0 0
  %1807 = vmatprep.subr.bf16.mxu0 0
  %1808 = vmatpush1.bf16.msra.mxu0 0
  %1809 = vmatprep.subr.bf16.mxu0 0
  %1810 = vmatpush1.bf16.msra.mxu0 0
  %1811 = vmatprep.subr.bf16.mxu0 0
  %1812 = vmatpush1.bf16.msra.mxu0 0
  %1813 = vmatprep.subr.bf16.mxu0 0
  %1814 = vmatpush1.bf16.msra.mxu0 0
  %1815 = vmatprep.subr.bf16.mxu0 0
  %1816 = vmatpush1.bf16.msra.mxu0 0
  %1817 = vmatprep.subr.bf16.mxu0 0
  %1818 = vmatpush1.bf16.msra.mxu0 0
  %1819 = vmatprep.subr.bf16.mxu0 %v1762
  %1820 = vmatpush1.bf16.msra.mxu0 %v1759
  %1821 = vmatprep.subr.bf16.mxu0 0
  %1822 = vmatpush2.bf16.msra.mxu0 0
  %1823 = vmatprep.subr.bf16.mxu0 0
  %1824 = vmatpush2.bf16.msra.mxu0 0
  %1825 = vmatprep.subr.bf16.mxu0 0
  %1826 = vmatpush2.bf16.msra.mxu0 0
  %1827 = vmatprep.subr.bf16.mxu0 0
  %1828 = vmatpush2.bf16.msra.mxu0 0
  %1829 = vmatprep.subr.bf16.mxu0 0
  %1830 = vmatpush2.bf16.msra.mxu0 0
  %1831 = vmatprep.subr.bf16.mxu0 0
  %1832 = vmatpush2.bf16.msra.mxu0 0
  %1833 = vmatprep.subr.bf16.mxu0 0
  %1834 = vmatpush2.bf16.msra.mxu0 0
  %1835 = vmatprep.subr.bf16.mxu0 0
  %1836 = vmatpush2.bf16.msra.mxu0 0
  %1837 = vmatprep.mubr.bf16.mxu0 0
  %1838 = vmatmul.mubr.bf16.gmra.mxu0 %v1750
  %v1839 = vpop.f32.mrf.mxu0
  %v1840 = vadd.f32 0.0, %v1839
  %v1841 = vpop.f32.mrf.mxu0
  %v1842 = vadd.f32 0.0, %v1841
  %v1843 = vpop.f32.mrf.mxu0
  %v1844 = vpop.f32.mrf.mxu0
  %1845 = vdwg.mxu0
  %v1846 = vadd.f32 %v1723, %v1799
  %v1847 = vadd.f32 %v1724, %v1801
  %v1848 = vadd.f32 %v1725, %v1840
  %v1849 = vadd.f32 %v1726, %v1842
  %s1850 = scalar_lea.vmem %s4, 16
  %v1851 = vld [vmem:[%s1850] sm:$0xf]
  %v1852 = vpack.c.bf16 %v1361, %v1361
  %v1853 = vpack.c.bf16 %v1362, %v1362
  %v1854 = vpack.c.bf16 %v1363, %v1363
  %v1855 = vpack.c.bf16 %v1364, %v1364
  %v1857 = vsel %vm1408, %v1851, 0
  %v1860 = vsel %vm1412, %v1852, 0
  %v1863 = vsel %vm1412, %v1853, 0
  %v1866 = vsel %vm1412, %v1854, 0
  %v1869 = vsel %vm1412, %v1855, 0
  %1871 = vmatprep.subr.bf16.mxu0 0
  %1872 = vmatpush1.bf16.msra.mxu0 0
  %1873 = vmatprep.subr.bf16.mxu0 0
  %1874 = vmatpush1.bf16.msra.mxu0 0
  %1875 = vmatprep.subr.bf16.mxu0 0
  %1876 = vmatpush1.bf16.msra.mxu0 0
  %1877 = vmatprep.subr.bf16.mxu0 0
  %1878 = vmatpush1.bf16.msra.mxu0 0
  %1879 = vmatprep.subr.bf16.mxu0 0
  %1880 = vmatpush1.bf16.msra.mxu0 0
  %1881 = vmatprep.subr.bf16.mxu0 0
  %1882 = vmatpush1.bf16.msra.mxu0 0
  %1883 = vmatprep.subr.bf16.mxu0 0
  %1884 = vmatpush1.bf16.msra.mxu0 0
  %1885 = vmatprep.subr.bf16.mxu0 %v1863
  %1886 = vmatpush1.bf16.msra.mxu0 %v1860
  %1887 = vmatprep.subr.bf16.mxu0 0
  %1888 = vmatpush2.bf16.msra.mxu0 0
  %1889 = vmatprep.subr.bf16.mxu0 0
  %1890 = vmatpush2.bf16.msra.mxu0 0
  %1891 = vmatprep.subr.bf16.mxu0 0
  %1892 = vmatpush2.bf16.msra.mxu0 0
  %1893 = vmatprep.subr.bf16.mxu0 0
  %1894 = vmatpush2.bf16.msra.mxu0 0
  %1895 = vmatprep.subr.bf16.mxu0 0
  %1896 = vmatpush2.bf16.msra.mxu0 0
  %1897 = vmatprep.subr.bf16.mxu0 0
  %1898 = vmatpush2.bf16.msra.mxu0 0
  %1899 = vmatprep.subr.bf16.mxu0 0
  %1900 = vmatpush2.bf16.msra.mxu0 0
  %1901 = vmatprep.subr.bf16.mxu0 0
  %1902 = vmatpush2.bf16.msra.mxu0 0
  %1903 = vmatprep.mubr.bf16.mxu0 0
  %1904 = vmatmul.mubr.bf16.gmra.mxu0 %v1857
  %v1905 = vpop.f32.mrf.mxu0
  %v1906 = vadd.f32 0.0, %v1905
  %v1907 = vpop.f32.mrf.mxu0
  %v1908 = vadd.f32 0.0, %v1907
  %v1909 = vpop.f32.mrf.mxu0
  %v1910 = vpop.f32.mrf.mxu0
  %1911 = vdwg.mxu0
  %1912 = vmatprep.subr.bf16.mxu0 0
  %1913 = vmatpush1.bf16.msra.mxu0 0
  %1914 = vmatprep.subr.bf16.mxu0 0
  %1915 = vmatpush1.bf16.msra.mxu0 0
  %1916 = vmatprep.subr.bf16.mxu0 0
  %1917 = vmatpush1.bf16.msra.mxu0 0
  %1918 = vmatprep.subr.bf16.mxu0 0
  %1919 = vmatpush1.bf16.msra.mxu0 0
  %1920 = vmatprep.subr.bf16.mxu0 0
  %1921 = vmatpush1.bf16.msra.mxu0 0
  %1922 = vmatprep.subr.bf16.mxu0 0
  %1923 = vmatpush1.bf16.msra.mxu0 0
  %1924 = vmatprep.subr.bf16.mxu0 0
  %1925 = vmatpush1.bf16.msra.mxu0 0
  %1926 = vmatprep.subr.bf16.mxu0 %v1869
  %1927 = vmatpush1.bf16.msra.mxu0 %v1866
  %1928 = vmatprep.subr.bf16.mxu0 0
  %1929 = vmatpush2.bf16.msra.mxu0 0
  %1930 = vmatprep.subr.bf16.mxu0 0
  %1931 = vmatpush2.bf16.msra.mxu0 0
  %1932 = vmatprep.subr.bf16.mxu0 0
  %1933 = vmatpush2.bf16.msra.mxu0 0
  %1934 = vmatprep.subr.bf16.mxu0 0
  %1935 = vmatpush2.bf16.msra.mxu0 0
  %1936 = vmatprep.subr.bf16.mxu0 0
  %1937 = vmatpush2.bf16.msra.mxu0 0
  %1938 = vmatprep.subr.bf16.mxu0 0
  %1939 = vmatpush2.bf16.msra.mxu0 0
  %1940 = vmatprep.subr.bf16.mxu0 0
  %1941 = vmatpush2.bf16.msra.mxu0 0
  %1942 = vmatprep.subr.bf16.mxu0 0
  %1943 = vmatpush2.bf16.msra.mxu0 0
  %1944 = vmatprep.mubr.bf16.mxu0 0
  %1945 = vmatmul.mubr.bf16.gmra.mxu0 %v1857
  %v1946 = vpop.f32.mrf.mxu0
  %v1947 = vadd.f32 0.0, %v1946
  %v1948 = vpop.f32.mrf.mxu0
  %v1949 = vadd.f32 0.0, %v1948
  %v1950 = vpop.f32.mrf.mxu0
  %v1951 = vpop.f32.mrf.mxu0
  %1952 = vdwg.mxu0
  %v1953 = vadd.f32 %v1846, %v1906
  %v1954 = vadd.f32 %v1847, %v1908
  %v1955 = vadd.f32 %v1848, %v1947
  %v1956 = vadd.f32 %v1849, %v1949
  %1957 = vrot.lane.b32.xlu0 %v1361, 127
  %v1958 = vpop.permute.xlu0 %1957
  %1959 = vrot.lane.b32.xlu0 %v1362, 127
  %v1960 = vpop.permute.xlu0 %1959
  %1961 = vrot.lane.b32.xlu0 %v1363, 127
  %v1962 = vpop.permute.xlu0 %1961
  %1963 = vrot.lane.b32.xlu0 %v1364, 127
  %v1964 = vpop.permute.xlu0 %1963
  %v1965 = vsel %vm735, %v1962, %v1964
  %v1966 = vsel %vm735, %v1960, %v1962
  %v1967 = vsel %vm735, %v1958, %v1960
  %v1968 = vsel %vm735, %v1964, %v1958
  %v1969 = vmul.f32 %v1967, %v746
  %v1970 = vmul.f32 %v1966, %v750
  %v1971 = vmul.f32 %v1965, %v754
  %v1972 = vmul.f32 %v1968, %v758
  %s1973 = scalar_lea.vmem %s4, 20
  %v1974 = vld [vmem:[%s1973] sm:$0xf]
  %v1975 = vpack.c.bf16 %v1969, %v1969
  %v1976 = vpack.c.bf16 %v1970, %v1970
  %v1977 = vpack.c.bf16 %v1971, %v1971
  %v1978 = vpack.c.bf16 %v1972, %v1972
  %v1980 = vsel %vm1408, %v1974, 0
  %v1983 = vsel %vm1412, %v1975, 0
  %v1986 = vsel %vm1412, %v1976, 0
  %v1989 = vsel %vm1412, %v1977, 0
  %v1992 = vsel %vm1412, %v1978, 0
  %1994 = vmatprep.subr.bf16.mxu0 0
  %1995 = vmatpush1.bf16.msra.mxu0 0
  %1996 = vmatprep.subr.bf16.mxu0 0
  %1997 = vmatpush1.bf16.msra.mxu0 0
  %1998 = vmatprep.subr.bf16.mxu0 0
  %1999 = vmatpush1.bf16.msra.mxu0 0
  %2000 = vmatprep.subr.bf16.mxu0 0
  %2001 = vmatpush1.bf16.msra.mxu0 0
  %2002 = vmatprep.subr.bf16.mxu0 0
  %2003 = vmatpush1.bf16.msra.mxu0 0
  %2004 = vmatprep.subr.bf16.mxu0 0
  %2005 = vmatpush1.bf16.msra.mxu0 0
  %2006 = vmatprep.subr.bf16.mxu0 0
  %2007 = vmatpush1.bf16.msra.mxu0 0
  %2008 = vmatprep.subr.bf16.mxu0 %v1986
  %2009 = vmatpush1.bf16.msra.mxu0 %v1983
  %2010 = vmatprep.subr.bf16.mxu0 0
  %2011 = vmatpush2.bf16.msra.mxu0 0
  %2012 = vmatprep.subr.bf16.mxu0 0
  %2013 = vmatpush2.bf16.msra.mxu0 0
  %2014 = vmatprep.subr.bf16.mxu0 0
  %2015 = vmatpush2.bf16.msra.mxu0 0
  %2016 = vmatprep.subr.bf16.mxu0 0
  %2017 = vmatpush2.bf16.msra.mxu0 0
  %2018 = vmatprep.subr.bf16.mxu0 0
  %2019 = vmatpush2.bf16.msra.mxu0 0
  %2020 = vmatprep.subr.bf16.mxu0 0
  %2021 = vmatpush2.bf16.msra.mxu0 0
  %2022 = vmatprep.subr.bf16.mxu0 0
  %2023 = vmatpush2.bf16.msra.mxu0 0
  %2024 = vmatprep.subr.bf16.mxu0 0
  %2025 = vmatpush2.bf16.msra.mxu0 0
  %2026 = vmatprep.mubr.bf16.mxu0 0
  %2027 = vmatmul.mubr.bf16.gmra.mxu0 %v1980
  %v2028 = vpop.f32.mrf.mxu0
  %v2029 = vadd.f32 0.0, %v2028
  %v2030 = vpop.f32.mrf.mxu0
  %v2031 = vadd.f32 0.0, %v2030
  %v2032 = vpop.f32.mrf.mxu0
  %v2033 = vpop.f32.mrf.mxu0
  %2034 = vdwg.mxu0
  %2035 = vmatprep.subr.bf16.mxu0 0
  %2036 = vmatpush1.bf16.msra.mxu0 0
  %2037 = vmatprep.subr.bf16.mxu0 0
  %2038 = vmatpush1.bf16.msra.mxu0 0
  %2039 = vmatprep.subr.bf16.mxu0 0
  %2040 = vmatpush1.bf16.msra.mxu0 0
  %2041 = vmatprep.subr.bf16.mxu0 0
  %2042 = vmatpush1.bf16.msra.mxu0 0
  %2043 = vmatprep.subr.bf16.mxu0 0
  %2044 = vmatpush1.bf16.msra.mxu0 0
  %2045 = vmatprep.subr.bf16.mxu0 0
  %2046 = vmatpush1.bf16.msra.mxu0 0
  %2047 = vmatprep.subr.bf16.mxu0 0
  %2048 = vmatpush1.bf16.msra.mxu0 0
  %2049 = vmatprep.subr.bf16.mxu0 %v1992
  %2050 = vmatpush1.bf16.msra.mxu0 %v1989
  %2051 = vmatprep.subr.bf16.mxu0 0
  %2052 = vmatpush2.bf16.msra.mxu0 0
  %2053 = vmatprep.subr.bf16.mxu0 0
  %2054 = vmatpush2.bf16.msra.mxu0 0
  %2055 = vmatprep.subr.bf16.mxu0 0
  %2056 = vmatpush2.bf16.msra.mxu0 0
  %2057 = vmatprep.subr.bf16.mxu0 0
  %2058 = vmatpush2.bf16.msra.mxu0 0
  %2059 = vmatprep.subr.bf16.mxu0 0
  %2060 = vmatpush2.bf16.msra.mxu0 0
  %2061 = vmatprep.subr.bf16.mxu0 0
  %2062 = vmatpush2.bf16.msra.mxu0 0
  %2063 = vmatprep.subr.bf16.mxu0 0
  %2064 = vmatpush2.bf16.msra.mxu0 0
  %2065 = vmatprep.subr.bf16.mxu0 0
  %2066 = vmatpush2.bf16.msra.mxu0 0
  %2067 = vmatprep.mubr.bf16.mxu0 0
  %2068 = vmatmul.mubr.bf16.gmra.mxu0 %v1980
  %v2069 = vpop.f32.mrf.mxu0
  %v2070 = vadd.f32 0.0, %v2069
  %v2071 = vpop.f32.mrf.mxu0
  %v2072 = vadd.f32 0.0, %v2071
  %v2073 = vpop.f32.mrf.mxu0
  %v2074 = vpop.f32.mrf.mxu0
  %2075 = vdwg.mxu0
  %v2076 = vadd.f32 %v1953, %v2029
  %v2077 = vadd.f32 %v1954, %v2031
  %v2078 = vadd.f32 %v1955, %v2070
  %v2079 = vadd.f32 %v1956, %v2072
  %2080 = vrot.lane.b32.xlu0 %v1361, 113
  %v2081 = vpop.permute.xlu0 %2080
  %2082 = vrot.lane.b32.xlu0 %v1362, 113
  %v2083 = vpop.permute.xlu0 %2082
  %2084 = vrot.lane.b32.xlu0 %v1363, 113
  %v2085 = vpop.permute.xlu0 %2084
  %2086 = vrot.lane.b32.xlu0 %v1364, 113
  %v2087 = vpop.permute.xlu0 %2086
  %v2088 = vsel %vm882, %v2085, %v2087
  %v2089 = vsel %vm882, %v2083, %v2085
  %v2090 = vsel %vm882, %v2081, %v2083
  %v2091 = vsel %vm882, %v2087, %v2081
  %v2092 = vmul.f32 %v2090, %v893
  %v2093 = vmul.f32 %v2089, %v897
  %v2094 = vmul.f32 %v2088, %v901
  %v2095 = vmul.f32 %v2091, %v905
  %s2096 = scalar_lea.vmem %s4, 24
  %v2097 = vld [vmem:[%s2096] sm:$0xf]
  %v2098 = vpack.c.bf16 %v2092, %v2092
  %v2099 = vpack.c.bf16 %v2093, %v2093
  %v2100 = vpack.c.bf16 %v2094, %v2094
  %v2101 = vpack.c.bf16 %v2095, %v2095
  %v2103 = vsel %vm1408, %v2097, 0
  %v2106 = vsel %vm1412, %v2098, 0
  %v2109 = vsel %vm1412, %v2099, 0
  %v2112 = vsel %vm1412, %v2100, 0
  %v2115 = vsel %vm1412, %v2101, 0
  %2117 = vmatprep.subr.bf16.mxu0 0
  %2118 = vmatpush1.bf16.msra.mxu0 0
  %2119 = vmatprep.subr.bf16.mxu0 0
  %2120 = vmatpush1.bf16.msra.mxu0 0
  %2121 = vmatprep.subr.bf16.mxu0 0
  %2122 = vmatpush1.bf16.msra.mxu0 0
  %2123 = vmatprep.subr.bf16.mxu0 0
  %2124 = vmatpush1.bf16.msra.mxu0 0
  %2125 = vmatprep.subr.bf16.mxu0 0
  %2126 = vmatpush1.bf16.msra.mxu0 0
  %2127 = vmatprep.subr.bf16.mxu0 0
  %2128 = vmatpush1.bf16.msra.mxu0 0
  %2129 = vmatprep.subr.bf16.mxu0 0
  %2130 = vmatpush1.bf16.msra.mxu0 0
  %2131 = vmatprep.subr.bf16.mxu0 %v2109
  %2132 = vmatpush1.bf16.msra.mxu0 %v2106
  %2133 = vmatprep.subr.bf16.mxu0 0
  %2134 = vmatpush2.bf16.msra.mxu0 0
  %2135 = vmatprep.subr.bf16.mxu0 0
  %2136 = vmatpush2.bf16.msra.mxu0 0
  %2137 = vmatprep.subr.bf16.mxu0 0
  %2138 = vmatpush2.bf16.msra.mxu0 0
  %2139 = vmatprep.subr.bf16.mxu0 0
  %2140 = vmatpush2.bf16.msra.mxu0 0
  %2141 = vmatprep.subr.bf16.mxu0 0
  %2142 = vmatpush2.bf16.msra.mxu0 0
  %2143 = vmatprep.subr.bf16.mxu0 0
  %2144 = vmatpush2.bf16.msra.mxu0 0
  %2145 = vmatprep.subr.bf16.mxu0 0
  %2146 = vmatpush2.bf16.msra.mxu0 0
  %2147 = vmatprep.subr.bf16.mxu0 0
  %2148 = vmatpush2.bf16.msra.mxu0 0
  %2149 = vmatprep.mubr.bf16.mxu0 0
  %2150 = vmatmul.mubr.bf16.gmra.mxu0 %v2103
  %v2151 = vpop.f32.mrf.mxu0
  %v2152 = vadd.f32 0.0, %v2151
  %v2153 = vpop.f32.mrf.mxu0
  %v2154 = vadd.f32 0.0, %v2153
  %v2155 = vpop.f32.mrf.mxu0
  %v2156 = vpop.f32.mrf.mxu0
  %2157 = vdwg.mxu0
  %2158 = vmatprep.subr.bf16.mxu0 0
  %2159 = vmatpush1.bf16.msra.mxu0 0
  %2160 = vmatprep.subr.bf16.mxu0 0
  %2161 = vmatpush1.bf16.msra.mxu0 0
  %2162 = vmatprep.subr.bf16.mxu0 0
  %2163 = vmatpush1.bf16.msra.mxu0 0
  %2164 = vmatprep.subr.bf16.mxu0 0
  %2165 = vmatpush1.bf16.msra.mxu0 0
  %2166 = vmatprep.subr.bf16.mxu0 0
  %2167 = vmatpush1.bf16.msra.mxu0 0
  %2168 = vmatprep.subr.bf16.mxu0 0
  %2169 = vmatpush1.bf16.msra.mxu0 0
  %2170 = vmatprep.subr.bf16.mxu0 0
  %2171 = vmatpush1.bf16.msra.mxu0 0
  %2172 = vmatprep.subr.bf16.mxu0 %v2115
  %2173 = vmatpush1.bf16.msra.mxu0 %v2112
  %2174 = vmatprep.subr.bf16.mxu0 0
  %2175 = vmatpush2.bf16.msra.mxu0 0
  %2176 = vmatprep.subr.bf16.mxu0 0
  %2177 = vmatpush2.bf16.msra.mxu0 0
  %2178 = vmatprep.subr.bf16.mxu0 0
  %2179 = vmatpush2.bf16.msra.mxu0 0
  %2180 = vmatprep.subr.bf16.mxu0 0
  %2181 = vmatpush2.bf16.msra.mxu0 0
  %2182 = vmatprep.subr.bf16.mxu0 0
  %2183 = vmatpush2.bf16.msra.mxu0 0
  %2184 = vmatprep.subr.bf16.mxu0 0
  %2185 = vmatpush2.bf16.msra.mxu0 0
  %2186 = vmatprep.subr.bf16.mxu0 0
  %2187 = vmatpush2.bf16.msra.mxu0 0
  %2188 = vmatprep.subr.bf16.mxu0 0
  %2189 = vmatpush2.bf16.msra.mxu0 0
  %2190 = vmatprep.mubr.bf16.mxu0 0
  %2191 = vmatmul.mubr.bf16.gmra.mxu0 %v2103
  %v2192 = vpop.f32.mrf.mxu0
  %v2193 = vadd.f32 0.0, %v2192
  %v2194 = vpop.f32.mrf.mxu0
  %v2195 = vadd.f32 0.0, %v2194
  %v2196 = vpop.f32.mrf.mxu0
  %v2197 = vpop.f32.mrf.mxu0
  %2198 = vdwg.mxu0
  %v2199 = vadd.f32 %v2076, %v2152
  %v2200 = vadd.f32 %v2077, %v2154
  %v2201 = vadd.f32 %v2078, %v2193
  %v2202 = vadd.f32 %v2079, %v2195
  %2203 = vrot.lane.b32.xlu0 %v1361, 112
  %v2204 = vpop.permute.xlu0 %2203
  %2205 = vrot.lane.b32.xlu0 %v1362, 112
  %v2206 = vpop.permute.xlu0 %2205
  %2207 = vrot.lane.b32.xlu0 %v1363, 112
  %v2208 = vpop.permute.xlu0 %2207
  %2209 = vrot.lane.b32.xlu0 %v1364, 112
  %v2210 = vpop.permute.xlu0 %2209
  %v2211 = vsel %vm1029, %v2208, %v2210
  %v2212 = vsel %vm1029, %v2206, %v2208
  %v2213 = vsel %vm1029, %v2204, %v2206
  %v2214 = vsel %vm1029, %v2210, %v2204
  %v2215 = vmul.f32 %v2213, %v1040
  %v2216 = vmul.f32 %v2212, %v1044
  %v2217 = vmul.f32 %v2211, %v1048
  %v2218 = vmul.f32 %v2214, %v1052
  %s2219 = scalar_lea.vmem %s4, 28
  %v2220 = vld [vmem:[%s2219] sm:$0xf]
  %v2221 = vpack.c.bf16 %v2215, %v2215
  %v2222 = vpack.c.bf16 %v2216, %v2216
  %v2223 = vpack.c.bf16 %v2217, %v2217
  %v2224 = vpack.c.bf16 %v2218, %v2218
  %v2226 = vsel %vm1408, %v2220, 0
  %v2229 = vsel %vm1412, %v2221, 0
  %v2232 = vsel %vm1412, %v2222, 0
  %v2235 = vsel %vm1412, %v2223, 0
  %v2238 = vsel %vm1412, %v2224, 0
  %2240 = vmatprep.subr.bf16.mxu0 0
  %2241 = vmatpush1.bf16.msra.mxu0 0
  %2242 = vmatprep.subr.bf16.mxu0 0
  %2243 = vmatpush1.bf16.msra.mxu0 0
  %2244 = vmatprep.subr.bf16.mxu0 0
  %2245 = vmatpush1.bf16.msra.mxu0 0
  %2246 = vmatprep.subr.bf16.mxu0 0
  %2247 = vmatpush1.bf16.msra.mxu0 0
  %2248 = vmatprep.subr.bf16.mxu0 0
  %2249 = vmatpush1.bf16.msra.mxu0 0
  %2250 = vmatprep.subr.bf16.mxu0 0
  %2251 = vmatpush1.bf16.msra.mxu0 0
  %2252 = vmatprep.subr.bf16.mxu0 0
  %2253 = vmatpush1.bf16.msra.mxu0 0
  %2254 = vmatprep.subr.bf16.mxu0 %v2232
  %2255 = vmatpush1.bf16.msra.mxu0 %v2229
  %2256 = vmatprep.subr.bf16.mxu0 0
  %2257 = vmatpush2.bf16.msra.mxu0 0
  %2258 = vmatprep.subr.bf16.mxu0 0
  %2259 = vmatpush2.bf16.msra.mxu0 0
  %2260 = vmatprep.subr.bf16.mxu0 0
  %2261 = vmatpush2.bf16.msra.mxu0 0
  %2262 = vmatprep.subr.bf16.mxu0 0
  %2263 = vmatpush2.bf16.msra.mxu0 0
  %2264 = vmatprep.subr.bf16.mxu0 0
  %2265 = vmatpush2.bf16.msra.mxu0 0
  %2266 = vmatprep.subr.bf16.mxu0 0
  %2267 = vmatpush2.bf16.msra.mxu0 0
  %2268 = vmatprep.subr.bf16.mxu0 0
  %2269 = vmatpush2.bf16.msra.mxu0 0
  %2270 = vmatprep.subr.bf16.mxu0 0
  %2271 = vmatpush2.bf16.msra.mxu0 0
  %2272 = vmatprep.mubr.bf16.mxu0 0
  %2273 = vmatmul.mubr.bf16.gmra.mxu0 %v2226
  %v2274 = vpop.f32.mrf.mxu0
  %v2275 = vadd.f32 0.0, %v2274
  %v2276 = vpop.f32.mrf.mxu0
  %v2277 = vadd.f32 0.0, %v2276
  %v2278 = vpop.f32.mrf.mxu0
  %v2279 = vpop.f32.mrf.mxu0
  %2280 = vdwg.mxu0
  %2281 = vmatprep.subr.bf16.mxu0 0
  %2282 = vmatpush1.bf16.msra.mxu0 0
  %2283 = vmatprep.subr.bf16.mxu0 0
  %2284 = vmatpush1.bf16.msra.mxu0 0
  %2285 = vmatprep.subr.bf16.mxu0 0
  %2286 = vmatpush1.bf16.msra.mxu0 0
  %2287 = vmatprep.subr.bf16.mxu0 0
  %2288 = vmatpush1.bf16.msra.mxu0 0
  %2289 = vmatprep.subr.bf16.mxu0 0
  %2290 = vmatpush1.bf16.msra.mxu0 0
  %2291 = vmatprep.subr.bf16.mxu0 0
  %2292 = vmatpush1.bf16.msra.mxu0 0
  %2293 = vmatprep.subr.bf16.mxu0 0
  %2294 = vmatpush1.bf16.msra.mxu0 0
  %2295 = vmatprep.subr.bf16.mxu0 %v2238
  %2296 = vmatpush1.bf16.msra.mxu0 %v2235
  %2297 = vmatprep.subr.bf16.mxu0 0
  %2298 = vmatpush2.bf16.msra.mxu0 0
  %2299 = vmatprep.subr.bf16.mxu0 0
  %2300 = vmatpush2.bf16.msra.mxu0 0
  %2301 = vmatprep.subr.bf16.mxu0 0
  %2302 = vmatpush2.bf16.msra.mxu0 0
  %2303 = vmatprep.subr.bf16.mxu0 0
  %2304 = vmatpush2.bf16.msra.mxu0 0
  %2305 = vmatprep.subr.bf16.mxu0 0
  %2306 = vmatpush2.bf16.msra.mxu0 0
  %2307 = vmatprep.subr.bf16.mxu0 0
  %2308 = vmatpush2.bf16.msra.mxu0 0
  %2309 = vmatprep.subr.bf16.mxu0 0
  %2310 = vmatpush2.bf16.msra.mxu0 0
  %2311 = vmatprep.subr.bf16.mxu0 0
  %2312 = vmatpush2.bf16.msra.mxu0 0
  %2313 = vmatprep.mubr.bf16.mxu0 0
  %2314 = vmatmul.mubr.bf16.gmra.mxu0 %v2226
  %v2315 = vpop.f32.mrf.mxu0
  %v2316 = vadd.f32 0.0, %v2315
  %v2317 = vpop.f32.mrf.mxu0
  %v2318 = vadd.f32 0.0, %v2317
  %v2319 = vpop.f32.mrf.mxu0
  %v2320 = vpop.f32.mrf.mxu0
  %2321 = vdwg.mxu0
  %v2322 = vadd.f32 %v2199, %v2275
  %v2323 = vadd.f32 %v2200, %v2277
  %v2324 = vadd.f32 %v2201, %v2316
  %v2325 = vadd.f32 %v2202, %v2318
  %2326 = vrot.lane.b32.xlu0 %v1361, 111
  %v2327 = vpop.permute.xlu0 %2326
  %2328 = vrot.lane.b32.xlu0 %v1362, 111
  %v2329 = vpop.permute.xlu0 %2328
  %2330 = vrot.lane.b32.xlu0 %v1363, 111
  %v2331 = vpop.permute.xlu0 %2330
  %2332 = vrot.lane.b32.xlu0 %v1364, 111
  %v2333 = vpop.permute.xlu0 %2332
  %v2334 = vsel %vm1176, %v2331, %v2333
  %v2335 = vsel %vm1176, %v2329, %v2331
  %v2336 = vsel %vm1176, %v2327, %v2329
  %v2337 = vsel %vm1176, %v2333, %v2327
  %v2338 = vmul.f32 %v2336, %v1187
  %v2339 = vmul.f32 %v2335, %v1191
  %v2340 = vmul.f32 %v2334, %v1195
  %v2341 = vmul.f32 %v2337, %v1199
  %s2342 = scalar_lea.vmem %s4, 32
  %v2343 = vld [vmem:[%s2342] sm:$0xf]
  %v2344 = vpack.c.bf16 %v2338, %v2338
  %v2345 = vpack.c.bf16 %v2339, %v2339
  %v2346 = vpack.c.bf16 %v2340, %v2340
  %v2347 = vpack.c.bf16 %v2341, %v2341
  %v2349 = vsel %vm1408, %v2343, 0
  %v2352 = vsel %vm1412, %v2344, 0
  %v2355 = vsel %vm1412, %v2345, 0
  %v2358 = vsel %vm1412, %v2346, 0
  %v2361 = vsel %vm1412, %v2347, 0
  %2363 = vmatprep.subr.bf16.mxu0 0
  %2364 = vmatpush1.bf16.msra.mxu0 0
  %2365 = vmatprep.subr.bf16.mxu0 0
  %2366 = vmatpush1.bf16.msra.mxu0 0
  %2367 = vmatprep.subr.bf16.mxu0 0
  %2368 = vmatpush1.bf16.msra.mxu0 0
  %2369 = vmatprep.subr.bf16.mxu0 0
  %2370 = vmatpush1.bf16.msra.mxu0 0
  %2371 = vmatprep.subr.bf16.mxu0 0
  %2372 = vmatpush1.bf16.msra.mxu0 0
  %2373 = vmatprep.subr.bf16.mxu0 0
  %2374 = vmatpush1.bf16.msra.mxu0 0
  %2375 = vmatprep.subr.bf16.mxu0 0
  %2376 = vmatpush1.bf16.msra.mxu0 0
  %2377 = vmatprep.subr.bf16.mxu0 %v2355
  %2378 = vmatpush1.bf16.msra.mxu0 %v2352
  %2379 = vmatprep.subr.bf16.mxu0 0
  %2380 = vmatpush2.bf16.msra.mxu0 0
  %2381 = vmatprep.subr.bf16.mxu0 0
  %2382 = vmatpush2.bf16.msra.mxu0 0
  %2383 = vmatprep.subr.bf16.mxu0 0
  %2384 = vmatpush2.bf16.msra.mxu0 0
  %2385 = vmatprep.subr.bf16.mxu0 0
  %2386 = vmatpush2.bf16.msra.mxu0 0
  %2387 = vmatprep.subr.bf16.mxu0 0
  %2388 = vmatpush2.bf16.msra.mxu0 0
  %2389 = vmatprep.subr.bf16.mxu0 0
  %2390 = vmatpush2.bf16.msra.mxu0 0
  %2391 = vmatprep.subr.bf16.mxu0 0
  %2392 = vmatpush2.bf16.msra.mxu0 0
  %2393 = vmatprep.subr.bf16.mxu0 0
  %2394 = vmatpush2.bf16.msra.mxu0 0
  %2395 = vmatprep.mubr.bf16.mxu0 0
  %2396 = vmatmul.mubr.bf16.gmra.mxu0 %v2349
  %v2397 = vpop.f32.mrf.mxu0
  %v2398 = vadd.f32 0.0, %v2397
  %v2399 = vpop.f32.mrf.mxu0
  %v2400 = vadd.f32 0.0, %v2399
  %v2401 = vpop.f32.mrf.mxu0
  %v2402 = vpop.f32.mrf.mxu0
  %2403 = vdwg.mxu0
  %2404 = vmatprep.subr.bf16.mxu0 0
  %2405 = vmatpush1.bf16.msra.mxu0 0
  %2406 = vmatprep.subr.bf16.mxu0 0
  %2407 = vmatpush1.bf16.msra.mxu0 0
  %2408 = vmatprep.subr.bf16.mxu0 0
  %2409 = vmatpush1.bf16.msra.mxu0 0
  %2410 = vmatprep.subr.bf16.mxu0 0
  %2411 = vmatpush1.bf16.msra.mxu0 0
  %2412 = vmatprep.subr.bf16.mxu0 0
  %2413 = vmatpush1.bf16.msra.mxu0 0
  %2414 = vmatprep.subr.bf16.mxu0 0
  %2415 = vmatpush1.bf16.msra.mxu0 0
  %2416 = vmatprep.subr.bf16.mxu0 0
  %2417 = vmatpush1.bf16.msra.mxu0 0
  %2418 = vmatprep.subr.bf16.mxu0 %v2361
  %2419 = vmatpush1.bf16.msra.mxu0 %v2358
  %2420 = vmatprep.subr.bf16.mxu0 0
  %2421 = vmatpush2.bf16.msra.mxu0 0
  %2422 = vmatprep.subr.bf16.mxu0 0
  %2423 = vmatpush2.bf16.msra.mxu0 0
  %2424 = vmatprep.subr.bf16.mxu0 0
  %2425 = vmatpush2.bf16.msra.mxu0 0
  %2426 = vmatprep.subr.bf16.mxu0 0
  %2427 = vmatpush2.bf16.msra.mxu0 0
  %2428 = vmatprep.subr.bf16.mxu0 0
  %2429 = vmatpush2.bf16.msra.mxu0 0
  %2430 = vmatprep.subr.bf16.mxu0 0
  %2431 = vmatpush2.bf16.msra.mxu0 0
  %2432 = vmatprep.subr.bf16.mxu0 0
  %2433 = vmatpush2.bf16.msra.mxu0 0
  %2434 = vmatprep.subr.bf16.mxu0 0
  %2435 = vmatpush2.bf16.msra.mxu0 0
  %2436 = vmatprep.mubr.bf16.mxu0 0
  %2437 = vmatmul.mubr.bf16.gmra.mxu0 %v2349
  %v2438 = vpop.f32.mrf.mxu0
  %v2439 = vadd.f32 0.0, %v2438
  %v2440 = vpop.f32.mrf.mxu0
  %v2441 = vadd.f32 0.0, %v2440
  %v2442 = vpop.f32.mrf.mxu0
  %v2443 = vpop.f32.mrf.mxu0
  %2444 = vdwg.mxu0
  %v2445 = vadd.f32 %v2322, %v2398
  %v2446 = vadd.f32 %v2323, %v2400
  %v2447 = vadd.f32 %v2324, %v2439
  %v2448 = vadd.f32 %v2325, %v2441
  %v2449 = vadd.f32 %v2445, %v2446
  %v2450 = vadd.f32 %v2449, %v2447
  %v2451 = vadd.f32 %v2450, %v2448
  %2452 = vadd.xlane.f32.xlu0 %v2451
  %v2453 = vpop.xlane.xlu0 %2452
  %v2454 = vmul.f32 %v2453, 0.001953125
  %v2455 = vsub.f32 %v2445, %v2454
  %v2456 = vsub.f32 %v2446, %v2454
  %v2457 = vsub.f32 %v2447, %v2454
  %v2458 = vsub.f32 %v2448, %v2454
  %v2459 = vmul.f32 %v2455, %v2455
  %v2460 = vmul.f32 %v2456, %v2456
  %v2461 = vmul.f32 %v2457, %v2457
  %v2462 = vmul.f32 %v2458, %v2458
  %v2463 = vadd.f32 %v2459, %v2460
  %v2464 = vadd.f32 %v2463, %v2461
  %v2465 = vadd.f32 %v2464, %v2462
  %2466 = vadd.xlane.f32.xlu0 %v2465
  %v2467 = vpop.xlane.xlu0 %2466
  %v2468 = vmul.f32 %v2467, 0.001953125
  %v2469 = vadd.f32 %v2468, 1e-05
  %v2470 = vrsqrt.pop %v2469
  %v2471 = vmul.f32 %v2455, %v2470
  %v2472 = vmul.f32 %v2456, %v2470
  %v2473 = vmul.f32 %v2457, %v2470
  %v2474 = vmul.f32 %v2458, %v2470
  %v2475 = vld [vmem:[%s5] sm:$0xff]
  %2477 = vset.pattern.permute.xlu0 0
  %2478 = vperm.xlu0 %2477, %v2475
  %v2479 = vpop.permute.xlu0 %2478
  %v2481 = vmul.f32 %v2471, %v2479
  %v2482 = vmul.f32 %v2472, %v2479
  %v2483 = vmul.f32 %v2473, %v2479
  %v2484 = vmul.f32 %v2474, %v2479
  %v2485 = vld [vmem:[%s6] sm:$0xff]
  %2487 = vset.pattern.permute.xlu0 0
  %2488 = vperm.xlu0 %2487, %v2485
  %v2489 = vpop.permute.xlu0 %2488
  %v2491 = vadd.f32 %v2481, %v2489
  %v2492 = vadd.f32 %v2482, %v2489
  %v2493 = vadd.f32 %v2483, %v2489
  %v2494 = vadd.f32 %v2484, %v2489
  %v2495 = vmax.f32 %v30, 0.0
  %v2497 = vcombine.high %v2495, %v2495
  %2499 = vst [vmem:[%s8] sm:$0xf] %v2495
  %2500 = vst [vmem:[%s8 + $0x8] sm:$0xf] %v2497
  %v2501 = vmax.f32 %v2491, 0.0
  %v2502 = vmax.f32 %v2492, 0.0
  %v2505 = vrot.slane %v2501, 4
  %v2506 = vrot.slane %v2502, 4
  %2509 = vst [vmem:[%s8] sm:$0xf0] %v2505
  %2510 = vst [vmem:[%s8 + $0x8] sm:$0xf0] %v2506
  %2511 = vst [vmem:[%s8 + $0x10] sm:$0xf] %v2505
  %2512 = vst [vmem:[%s8 + $0x18] sm:$0xf] %v2506
  %v2513 = vmax.f32 %v31, 0.0
  %v2515 = vcombine.high %v2513, %v2513
  %s2517 = scalar_lea.vmem %s8, 32
  %2518 = vst [vmem:[%s2517] sm:$0xf] %v2513
  %2519 = vst [vmem:[%s2517 + $0x8] sm:$0xf] %v2515
  %v2520 = vmax.f32 %v2493, 0.0
  %v2521 = vmax.f32 %v2494, 0.0
  %v2524 = vrot.slane %v2520, 4
  %v2525 = vrot.slane %v2521, 4
  %2528 = vst [vmem:[%s2517] sm:$0xf0] %v2524
  %2529 = vst [vmem:[%s2517 + $0x8] sm:$0xf0] %v2525
  %2530 = vst [vmem:[%s2517 + $0x10] sm:$0xf] %v2524
  %2531 = vst [vmem:[%s2517 + $0x18] sm:$0xf] %v2525
  // Predicated region
  $region34: #{tpu_custom_call.1} parent=0 // pred_check
    _
  $region35: #{tpu_custom_call.1} parent=0 // pred_check_branch
    %2533 = sbr.rel (0) target = $region37
  $region36: #{tpu_custom_call.1} parent=0 // pred_region
    _
  $region37: #{tpu_custom_call.1} parent=0 // pred_fallthru
    _
  // Predicated region
  $region38: #{tpu_custom_call.1} parent=0 // pred_check
    _
  $region39: #{tpu_custom_call.1} parent=0 // pred_check_branch
    %2535 = sbr.rel (0) target = $region41
  $region40: #{tpu_custom_call.1} parent=0 // pred_region
    _
  $region41: #{tpu_custom_call.1} parent=0 // pred_fallthru
    _

</llo_original>
